<compile_context>
chip_gen: v7x
topology: tpu7x:2x2x1
jax: 0.10.0
libtpu: 0.0.40
codegen_flags: <defaults>
</compile_context>

<pallas_src>
import functools

import jax
import jax.numpy as jnp
from jax.experimental import pallas as pl
from jax.experimental.pallas import tpu as pltpu


LN_EPS = 1e-5  # PyTorch nn.LayerNorm default


# ----------------------------------------------------------------------------
# Fused kernel:  o = (SiLU(LayerNorm(h @ W1)) @ W2 + b2)     (one row-tile)
# ----------------------------------------------------------------------------
def _dynamics_kernel(h_ref, w1_ref, ln_g_ref, ln_b_ref, w2_ref, b2_ref, o_ref):
    # 1) Linear(h_size -> mlp_size), no bias.  MXU, f32 accumulation.
    x = jnp.dot(h_ref[...], w1_ref[...], preferred_element_type=jnp.float32)

    # 2) LayerNorm over the last (mlp_size) dim, with affine weight/bias.
    mu = jnp.mean(x, axis=-1, keepdims=True)
    xc = x - mu
    var = jnp.mean(xc * xc, axis=-1, keepdims=True)
    xn = xc * jax.lax.rsqrt(var + LN_EPS)
    xn = xn * ln_g_ref[...] + ln_b_ref[...]          # (1, M1) broadcasts over rows

    # 3) SiLU(x) = x * sigmoid(x)   (sigmoid -> EUP)
    a = xn * jax.nn.sigmoid(xn)

    # 4) Linear(mlp_size -> z_size*z_cls), with bias.  Lane-dense N = 1024.
    z = jnp.dot(a, w2_ref[...], preferred_element_type=jnp.float32) + b2_ref[...]

    o_ref[...] = z.astype(o_ref.dtype)


# ----------------------------------------------------------------------------
# Wrapper: one pallas_call, row-tiled grid, weights resident.
# ----------------------------------------------------------------------------
def dynamics_predictor_forward(params, h, *, z_size=32, z_cls=32, tm=None):
    """Returns logits of shape (B, z_size, z_cls)."""
    B, H = h.shape
    w1, w2 = params["w1"], params["w2"]
    M1 = w1.shape[1]
    N = w2.shape[1]
    assert N == z_size * z_cls

    ln_g = params["ln_g"].reshape(1, M1)
    ln_b = params["ln_b"].reshape(1, M1)
    b2 = params["b2"].reshape(1, N)

    # Row tile: full batch for toy sizes; 256-row tiles (8-aligned) when B scales.
    if tm is None:
        tm = B if B <= 256 else 256
    grid = (pl.cdiv(B, tm),)

    flops = 2 * B * (H * M1 + M1 * N) + 12 * B * M1
    bytes_accessed = 4 * (B * H + H * M1 + 2 * M1 + M1 * N + N + B * N)
    cost = pl.CostEstimate(
        flops=flops, transcendentals=B * M1, bytes_accessed=bytes_accessed
    )

    z_flat = pl.pallas_call(
        _dynamics_kernel,
        out_shape=jax.ShapeDtypeStruct((B, N), jnp.float32),
        grid=grid,
        in_specs=[
            pl.BlockSpec((tm, H), lambda i: (i, 0)),     # h rows stream
            pl.BlockSpec((H, M1), lambda i: (0, 0)),     # W1 resident
            pl.BlockSpec((1, M1), lambda i: (0, 0)),     # LayerNorm gamma
            pl.BlockSpec((1, M1), lambda i: (0, 0)),     # LayerNorm beta
            pl.BlockSpec((M1, N), lambda i: (0, 0)),     # W2 resident
            pl.BlockSpec((1, N), lambda i: (0, 0)),      # bias2
        ],
        out_specs=pl.BlockSpec((tm, N), lambda i: (i, 0)),
        compiler_params=pltpu.CompilerParams(
            dimension_semantics=("parallel",)
        ),
        cost_estimate=cost,
    )(h, w1, ln_g, ln_b, w2, b2)

    # Free reshape (logits slab is already lane-dense / contiguous).
    return z_flat.reshape(B, z_size, z_cls)


# ----------------------------------------------------------------------------
# Pure-JAX reference (for correctness check)
# ----------------------------------------------------------------------------
def _reference_forward(params, h, z_size=32, z_cls=32):
    x = jnp.dot(h, params["w1"], precision=jax.lax.Precision.HIGHEST)
    mu = x.mean(-1, keepdims=True)
    var = ((x - mu) ** 2).mean(-1, keepdims=True)
    xn = (x - mu) / jnp.sqrt(var + LN_EPS)
    xn = xn * params["ln_g"] + params["ln_b"]
    a = xn * jax.nn.sigmoid(xn)
    z = jnp.dot(a, params["w2"], precision=jax.lax.Precision.HIGHEST) + params["b2"]
    return z.reshape(h.shape[0], z_size, z_cls)


# ----------------------------------------------------------------------------
# Deterministic parameter construction (static Python ints NOT stored in params)
# ----------------------------------------------------------------------------
def make_params(key, h_size=512, mlp_size=640, z_size=32, z_cls=32):
    k1, k2, k3 = jax.random.split(key, 3)
    n_out = z_size * z_cls
    params = {
        "w1": jax.random.normal(k1, (h_size, mlp_size), jnp.float32)
        / jnp.sqrt(jnp.float32(h_size)),
        "ln_g": jnp.ones((mlp_size,), jnp.float32),
        "ln_b": jnp.zeros((mlp_size,), jnp.float32),
        "w2": jax.random.normal(k2, (mlp_size, n_out), jnp.float32)
        / jnp.sqrt(jnp.float32(mlp_size)),
        "b2": 0.01 * jax.random.normal(k3, (n_out,), jnp.float32),
    }
    return params


if __name__ == "__main__":
    key = jax.random.PRNGKey(0)
    kp, kh = jax.random.split(key, 2)

    B = 8
    H_SIZE, MLP_SIZE, Z_SIZE, Z_CLS = 512, 640, 32, 32  # module defaults

    params = make_params(kp, h_size=H_SIZE, mlp_size=MLP_SIZE,
                         z_size=Z_SIZE, z_cls=Z_CLS)
    h = jax.random.normal(kh, (B, H_SIZE), jnp.float32)

    fwd = jax.jit(
        functools.partial(dynamics_predictor_forward, z_size=Z_SIZE, z_cls=Z_CLS)
    )
    out = jax.block_until_ready(fwd(params, h))

    assert out.shape == (B, Z_SIZE, Z_CLS), out.shape
    assert out.dtype == jnp.float32
    assert bool(jnp.all(jnp.isfinite(out)))

    ref = _reference_forward(params, h, z_size=Z_SIZE, z_cls=Z_CLS)
    assert bool(jnp.allclose(out, ref, rtol=2e-2, atol=2e-2)), (
        float(jnp.max(jnp.abs(out - ref)))
    )

    print("KERNEL_OK")
</pallas_src>

<mosaic_0001>
module attributes {stable_mosaic.version = 11 : i64} {
  func.func @_dynamics_kernel(%arg0: i32, %arg1: memref<8x512xf32, #tpu.memory_space<vmem>>, %arg2: memref<512x640xf32, #tpu.memory_space<vmem>>, %arg3: memref<1x640xf32, #tpu.memory_space<vmem>>, %arg4: memref<1x640xf32, #tpu.memory_space<vmem>>, %arg5: memref<640x1024xf32, #tpu.memory_space<vmem>>, %arg6: memref<1x1024xf32, #tpu.memory_space<vmem>>, %arg7: memref<8x1024xf32, #tpu.memory_space<vmem>>) attributes {dimension_semantics = [#tpu.dimension_semantics<parallel>], iteration_bounds = array<i64: 1>, scalar_prefetch = 0 : i64, scratch_operands = 0 : i64, tpu.core_type = #tpu.core_type<tc>, window_params = [{transform_indices = @transform_0, window_bounds = array<i64: 8, 512>}, {pipeline_mode = #tpu.pipeline_mode<synchronous>, transform_indices = @transform_1, window_bounds = array<i64: 512, 640>}, {pipeline_mode = #tpu.pipeline_mode<synchronous>, transform_indices = @transform_2, window_bounds = array<i64: 1, 640>}, {pipeline_mode = #tpu.pipeline_mode<synchronous>, transform_indices = @transform_3, window_bounds = array<i64: 1, 640>}, {pipeline_mode = #tpu.pipeline_mode<synchronous>, transform_indices = @transform_4, window_bounds = array<i64: 640, 1024>}, {pipeline_mode = #tpu.pipeline_mode<synchronous>, transform_indices = @transform_5, window_bounds = array<i64: 1, 1024>}, {transform_indices = @transform_6, window_bounds = array<i64: 8, 1024>}]} {
    %c0 = arith.constant 0 : index
    %c0_0 = arith.constant 0 : index
    %0 = vector.load %arg1[%c0, %c0_0] : memref<8x512xf32, #tpu.memory_space<vmem>>, vector<8x512xf32>
    %c0_1 = arith.constant 0 : index
    %c0_2 = arith.constant 0 : index
    %1 = vector.load %arg2[%c0_1, %c0_2] : memref<512x640xf32, #tpu.memory_space<vmem>>, vector<512x640xf32>
    %cst = arith.constant dense<0.000000e+00> : vector<8x640xf32>
    %2 = tpu.matmul %0, %1, %cst {dimension_numbers = #tpu.dot_dimension_numbers<[1], [0], [0], [1], [0, 0, 1, 1], [], []>} : vector<8x512xf32>, vector<512x640xf32>, vector<8x640xf32> -> vector<8x640xf32>
    %cst_3 = arith.constant dense<0.000000e+00> : vector<8xf32>
    %3 = vector.multi_reduction <add>, %2, %cst_3 [1] : vector<8x640xf32> to vector<8xf32>
    %4 = vector.shape_cast %3 : vector<8xf32> to vector<8x1xf32>
    %cst_4 = arith.constant 6.400000e+02 : f32
    %5 = vector.broadcast %cst_4 : f32 to vector<8x1xf32>
    %6 = arith.divf %4, %5 : vector<8x1xf32>
    %7 = vector.broadcast %6 : vector<8x1xf32> to vector<8x640xf32>
    %8 = arith.subf %2, %7 : vector<8x640xf32>
    %9 = arith.mulf %8, %8 : vector<8x640xf32>
    %cst_5 = arith.constant dense<0.000000e+00> : vector<8xf32>
    %10 = vector.multi_reduction <add>, %9, %cst_5 [1] : vector<8x640xf32> to vector<8xf32>
    %11 = vector.shape_cast %10 : vector<8xf32> to vector<8x1xf32>
    %cst_6 = arith.constant 6.400000e+02 : f32
    %12 = vector.broadcast %cst_6 : f32 to vector<8x1xf32>
    %13 = arith.divf %11, %12 : vector<8x1xf32>
    %cst_7 = arith.constant 9.99999974E-6 : f32
    %14 = vector.broadcast %cst_7 : f32 to vector<8x1xf32>
    %15 = arith.addf %13, %14 : vector<8x1xf32>
    %16 = math.rsqrt %15 : vector<8x1xf32>
    %17 = vector.broadcast %16 : vector<8x1xf32> to vector<8x640xf32>
    %18 = arith.mulf %8, %17 : vector<8x640xf32>
    %c0_8 = arith.constant 0 : index
    %c0_9 = arith.constant 0 : index
    %19 = vector.load %arg3[%c0_8, %c0_9] : memref<1x640xf32, #tpu.memory_space<vmem>>, vector<1x640xf32>
    %20 = vector.broadcast %19 : vector<1x640xf32> to vector<8x640xf32>
    %21 = arith.mulf %18, %20 : vector<8x640xf32>
    %c0_10 = arith.constant 0 : index
    %c0_11 = arith.constant 0 : index
    %22 = vector.load %arg4[%c0_10, %c0_11] : memref<1x640xf32, #tpu.memory_space<vmem>>, vector<1x640xf32>
    %23 = vector.broadcast %22 : vector<1x640xf32> to vector<8x640xf32>
    %24 = arith.addf %21, %23 : vector<8x640xf32>
    %25 = arith.negf %24 : vector<8x640xf32>
    %26 = math.exp %25 : vector<8x640xf32>
    %cst_12 = arith.constant 1.000000e+00 : f32
    %27 = vector.broadcast %cst_12 : f32 to vector<8x640xf32>
    %28 = arith.addf %27, %26 : vector<8x640xf32>
    %29 = arith.divf %27, %28 : vector<8x640xf32>
    %30 = arith.mulf %24, %29 : vector<8x640xf32>
    %c0_13 = arith.constant 0 : index
    %c0_14 = arith.constant 0 : index
    %31 = vector.load %arg5[%c0_13, %c0_14] : memref<640x1024xf32, #tpu.memory_space<vmem>>, vector<640x1024xf32>
    %cst_15 = arith.constant dense<0.000000e+00> : vector<8x1024xf32>
    %32 = tpu.matmul %30, %31, %cst_15 {dimension_numbers = #tpu.dot_dimension_numbers<[1], [0], [0], [1], [0, 0, 1, 1], [], []>} : vector<8x640xf32>, vector<640x1024xf32>, vector<8x1024xf32> -> vector<8x1024xf32>
    %c0_16 = arith.constant 0 : index
    %c0_17 = arith.constant 0 : index
    %33 = vector.load %arg6[%c0_16, %c0_17] : memref<1x1024xf32, #tpu.memory_space<vmem>>, vector<1x1024xf32>
    %34 = vector.broadcast %33 : vector<1x1024xf32> to vector<8x1024xf32>
    %35 = arith.addf %32, %34 : vector<8x1024xf32>
    %c0_18 = arith.constant 0 : index
    %c0_19 = arith.constant 0 : index
    %36 = vector.load %arg7[%c0_18, %c0_19] : memref<8x1024xf32, #tpu.memory_space<vmem>>, vector<8x1024xf32>
    tpu.vector_store %arg7[%c0_18, %c0_19], %35 {strides = array<i32>} : memref<8x1024xf32, #tpu.memory_space<vmem>>, vector<8x1024xf32>,
    return
  }
  func.func @transform_0(%arg0: i32) -> (i32, i32) {
    %c0_i32 = arith.constant 0 : i32
    %c0_i32_0 = arith.constant 0 : i32
    return %arg0, %c0_i32 : i32, i32
  }
  func.func @transform_1(%arg0: i32) -> (i32, i32) {
    %c0_i32 = arith.constant 0 : i32
    %c0_i32_0 = arith.constant 0 : i32
    %c0_i32_1 = arith.constant 0 : i32
    return %c0_i32, %c0_i32_0 : i32, i32
  }
  func.func @transform_2(%arg0: i32) -> (i32, i32) {
    %c0_i32 = arith.constant 0 : i32
    %c0_i32_0 = arith.constant 0 : i32
    %c0_i32_1 = arith.constant 0 : i32
    return %c0_i32, %c0_i32_0 : i32, i32
  }
  func.func @transform_3(%arg0: i32) -> (i32, i32) {
    %c0_i32 = arith.constant 0 : i32
    %c0_i32_0 = arith.constant 0 : i32
    %c0_i32_1 = arith.constant 0 : i32
    return %c0_i32, %c0_i32_0 : i32, i32
  }
  func.func @transform_4(%arg0: i32) -> (i32, i32) {
    %c0_i32 = arith.constant 0 : i32
    %c0_i32_0 = arith.constant 0 : i32
    %c0_i32_1 = arith.constant 0 : i32
    return %c0_i32, %c0_i32_0 : i32, i32
  }
  func.func @transform_5(%arg0: i32) -> (i32, i32) {
    %c0_i32 = arith.constant 0 : i32
    %c0_i32_0 = arith.constant 0 : i32
    %c0_i32_1 = arith.constant 0 : i32
    return %c0_i32, %c0_i32_0 : i32, i32
  }
  func.func @transform_6(%arg0: i32) -> (i32, i32) {
    %c0_i32 = arith.constant 0 : i32
    %c0_i32_0 = arith.constant 0 : i32
    return %arg0, %c0_i32 : i32, i32
  }
}

</mosaic_0001>

<llo_original>
// kernel: dynamics_predictor_forward.1
$region0: #{dynamics_predictor_forward.1}
  #allocation0 [shape = 'u32[]', space=smem, size = 0x4, offset = 0x4, fixed_abs, tag = 'smem constant byte address 0x4 - core index']
  #allocation1 [shape = 'u32[144,128]{1,0:T(1,128)}', space=vmem, size = 0x12000, scoped, tag = 'internal scratch']
  %s0 = inlined_call_operand.hbm [shape: f32[8,512], index: 0, kind: input, shape index: {}]
  %s1 = inlined_call_operand.hbm [shape: f32[512,640], index: 1, kind: input, shape index: {}]
  %s2 = inlined_call_operand.vmem [shape: f32[1,640], index: 2, kind: input, shape index: {}]
  %s3 = inlined_call_operand.vmem [shape: f32[1,640], index: 3, kind: input, shape index: {}]
  %s4 = inlined_call_operand.hbm [shape: f32[640,1024], index: 4, kind: input, shape index: {}]
  %s5 = inlined_call_operand.hbm [shape: f32[1,1024], index: 5, kind: input, shape index: {}]
  %s6 = inlined_call_operand.vmem [shape: f32[8,1024], index: 6, kind: output, shape index: {}]
  %s7 = sld [smem:[#allocation0]]
  $region50: #{dynamics_predictor_forward.1} parent=0
    _
  %s9 = ssub.s32 1, %s7
  %s10 = scalar_select 0, %s9, %s7
  $region1: #{dynamics_predictor_forward.1} parent=0
    #allocation2 [shape = 'u8[16384]{0}', space=vmem, size = 0x4000, scoped, tag = 'input window, operand 0, single buffered']
    #allocation3 [shape = 's32[1]{0}', space=sflag, size = 0x4, scoped, tag = 'scoped memory for dynamics_predictor_forward.1']
    #allocation4 [shape = 'u8[1310720]{0}', space=vmem, size = 0x140000, scoped, tag = 'input window, operand 1, single buffered']
    #allocation5 [shape = 's32[1]{0}', space=sflag, size = 0x4, scoped, tag = 'scoped memory for dynamics_predictor_forward.1']
    #allocation6 [shape = 'u8[2621440]{0}', space=vmem, size = 0x280000, scoped, tag = 'input window, operand 4, single buffered']
    #allocation7 [shape = 'u8[4096]{0}', space=vmem, size = 0x1000, scoped, tag = 'input window, operand 5, single buffered']
    #allocation8 [shape = 's32[1]{0}', space=sflag, size = 0x4, scoped, tag = 'scoped memory for dynamics_predictor_forward.1']
    %11 = vsyncpa [#allocation3], 0
    %12 = vsyncpa [#allocation5], 0
    %13 = vsyncpa [#allocation8], 0
    // Predicated region
    $region2: #{dynamics_predictor_forward.1} parent=1 // pred_check
      _
    $region3: #{dynamics_predictor_forward.1} parent=1 // pred_check_branch
      %15 = sbr.rel (0) target = $region5
    $region4: #{dynamics_predictor_forward.1} parent=1 // pred_region
      %s17 = ssub.s32 512, 512
      %18 = vsyncadd [#allocation3], %s17
      %s20 = sshll.u32 [#allocation2], 4
      %s21 = int_to_ptr.vmem [resolvable:$true] %s20
      %23 = dma.hbm_to_vmem [thread:$0]  %s0, 512, %s21, [#allocation3]
    $region5: #{dynamics_predictor_forward.1} parent=1 // pred_fallthru
      _
    // Predicated region
    $region6: #{dynamics_predictor_forward.1} parent=1 // pred_check
      _
    $region7: #{dynamics_predictor_forward.1} parent=1 // pred_check_branch
      %25 = sbr.rel (0) target = $region9
    $region8: #{dynamics_predictor_forward.1} parent=1 // pred_region
      %s27 = ssub.s32 40960, 40960
      %28 = vsyncadd [#allocation5], %s27
      %s29 = sshll.u32 [#allocation4], 4
      %s30 = int_to_ptr.vmem [resolvable:$true] %s29
      %35 = dma.hbm_to_vmem [thread:$0]  %s1, 40960, %s30, [#allocation5], 640, 640, 40
    $region9: #{dynamics_predictor_forward.1} parent=1 // pred_fallthru
      _
    // Predicated region
    $region10: #{dynamics_predictor_forward.1} parent=1 // pred_check
      _
    $region11: #{dynamics_predictor_forward.1} parent=1 // pred_check_branch
      %37 = sbr.rel (0) target = $region13
    $region12: #{dynamics_predictor_forward.1} parent=1 // pred_region
      _
    $region13: #{dynamics_predictor_forward.1} parent=1 // pred_fallthru
      _
    // Predicated region
    $region14: #{dynamics_predictor_forward.1} parent=1 // pred_check
      _
    $region15: #{dynamics_predictor_forward.1} parent=1 // pred_check_branch
      %39 = sbr.rel (0) target = $region17
    $region16: #{dynamics_predictor_forward.1} parent=1 // pred_region
      _
    $region17: #{dynamics_predictor_forward.1} parent=1 // pred_fallthru
      _
    // Predicated region
    $region18: #{dynamics_predictor_forward.1} parent=1 // pred_check
      _
    $region19: #{dynamics_predictor_forward.1} parent=1 // pred_check_branch
      %41 = sbr.rel (0) target = $region21
    $region20: #{dynamics_predictor_forward.1} parent=1 // pred_region
      %s43 = ssub.s32 81920, 81920
      %44 = vsyncadd [#allocation5], %s43
      %s45 = sshll.u32 [#allocation6], 4
      %s46 = int_to_ptr.vmem [resolvable:$true] %s45
      %51 = dma.hbm_to_vmem [thread:$0]  %s4, 81920, %s46, [#allocation5], 1024, 1024, 64
    $region21: #{dynamics_predictor_forward.1} parent=1 // pred_fallthru
      _
    // Predicated region
    $region22: #{dynamics_predictor_forward.1} parent=1 // pred_check
      _
    $region23: #{dynamics_predictor_forward.1} parent=1 // pred_check_branch
      %53 = sbr.rel (0) target = $region25
    $region24: #{dynamics_predictor_forward.1} parent=1 // pred_region
      %s55 = ssub.s32 128, 128
      %56 = vsyncadd [#allocation8], %s55
      %s58 = sshll.u32 [#allocation7], 4
      %s59 = int_to_ptr.vmem [resolvable:$true] %s58
      %61 = dma.hbm_to_vmem [thread:$0]  %s5, 128, %s59, [#allocation8]
    $region25: #{dynamics_predictor_forward.1} parent=1 // pred_fallthru
      _
    // Predicated region
    $region26: #{dynamics_predictor_forward.1} parent=1 // pred_check
      _
    $region27: #{dynamics_predictor_forward.1} parent=1 // pred_check_branch
      %63 = sbr.rel (0) target = $region29
    $region28: #{dynamics_predictor_forward.1} parent=1 // pred_region
      %64 = dma.done [#allocation3], 512
    $region29: #{dynamics_predictor_forward.1} parent=1 // pred_fallthru
      _
    // Predicated region
    $region30: #{dynamics_predictor_forward.1} parent=1 // pred_check
      _
    $region31: #{dynamics_predictor_forward.1} parent=1 // pred_check_branch
      %66 = sbr.rel (0) target = $region33
    $region32: #{dynamics_predictor_forward.1} parent=1 // pred_region
      %67 = dma.done [#allocation5], 40960
    $region33: #{dynamics_predictor_forward.1} parent=1 // pred_fallthru
      _
    // Predicated region
    $region34: #{dynamics_predictor_forward.1} parent=1 // pred_check
      _
    $region35: #{dynamics_predictor_forward.1} parent=1 // pred_check_branch
      %69 = sbr.rel (0) target = $region37
    $region36: #{dynamics_predictor_forward.1} parent=1 // pred_region
      %70 = dma.done [#allocation5], 81920
    $region37: #{dynamics_predictor_forward.1} parent=1 // pred_fallthru
      _
    // Predicated region
    $region38: #{dynamics_predictor_forward.1} parent=1 // pred_check
      _
    $region39: #{dynamics_predictor_forward.1} parent=1 // pred_check_branch
      %72 = sbr.rel (0) target = $region41
    $region40: #{dynamics_predictor_forward.1} parent=1 // pred_region
      %73 = dma.done [#allocation8], 128
    $region41: #{dynamics_predictor_forward.1} parent=1 // pred_fallthru
      _
    %v74 = vld [vmem:[#allocation2] sm:$0xff]
    %v75 = vld [vmem:[#allocation2 + $0x8] sm:$0xff]
    %v76 = vld [vmem:[#allocation2 + $0x10] sm:$0xff]
    %v77 = vld [vmem:[#allocation2 + $0x18] sm:$0xff]
    %v78 = vld [vmem:[#allocation4] sm:$0xff]
    %v79 = vld [vmem:[#allocation4 + $0x8] sm:$0xff]
    %v80 = vld [vmem:[#allocation4 + $0x10] sm:$0xff]
    %v81 = vld [vmem:[#allocation4 + $0x18] sm:$0xff]
    %v82 = vld [vmem:[#allocation4 + $0x20] sm:$0xff]
    %v83 = vld [vmem:[#allocation4 + $0x28] sm:$0xff]
    %v84 = vld [vmem:[#allocation4 + $0x30] sm:$0xff]
    %v85 = vld [vmem:[#allocation4 + $0x38] sm:$0xff]
    %v86 = vld [vmem:[#allocation4 + $0x40] sm:$0xff]
    %v87 = vld [vmem:[#allocation4 + $0x48] sm:$0xff]
    %v88 = vld [vmem:[#allocation4 + $0x50] sm:$0xff]
    %v89 = vld [vmem:[#allocation4 + $0x58] sm:$0xff]
    %v90 = vld [vmem:[#allocation4 + $0x60] sm:$0xff]
    %v91 = vld [vmem:[#allocation4 + $0x68] sm:$0xff]
    %v92 = vld [vmem:[#allocation4 + $0x70] sm:$0xff]
    %v93 = vld [vmem:[#allocation4 + $0x78] sm:$0xff]
    %v94 = vld [vmem:[#allocation4 + $0x80] sm:$0xff]
    %v95 = vld [vmem:[#allocation4 + $0x88] sm:$0xff]
    %v96 = vld [vmem:[#allocation4 + $0x90] sm:$0xff]
    %v97 = vld [vmem:[#allocation4 + $0x98] sm:$0xff]
    %v98 = vld [vmem:[#allocation4 + $0xa0] sm:$0xff]
    %v99 = vld [vmem:[#allocation4 + $0xa8] sm:$0xff]
    %v100 = vld [vmem:[#allocation4 + $0xb0] sm:$0xff]
    %v101 = vld [vmem:[#allocation4 + $0xb8] sm:$0xff]
    %v102 = vld [vmem:[#allocation4 + $0xc0] sm:$0xff]
    %v103 = vld [vmem:[#allocation4 + $0xc8] sm:$0xff]
    %v104 = vld [vmem:[#allocation4 + $0xd0] sm:$0xff]
    %v105 = vld [vmem:[#allocation4 + $0xd8] sm:$0xff]
    %v106 = vld [vmem:[#allocation4 + $0xe0] sm:$0xff]
    %v107 = vld [vmem:[#allocation4 + $0xe8] sm:$0xff]
    %v108 = vld [vmem:[#allocation4 + $0xf0] sm:$0xff]
    %v109 = vld [vmem:[#allocation4 + $0xf8] sm:$0xff]
    %v110 = vld [vmem:[#allocation4 + $0x100] sm:$0xff]
    %v111 = vld [vmem:[#allocation4 + $0x108] sm:$0xff]
    %v112 = vld [vmem:[#allocation4 + $0x110] sm:$0xff]
    %v113 = vld [vmem:[#allocation4 + $0x118] sm:$0xff]
    %v114 = vld [vmem:[#allocation4 + $0x120] sm:$0xff]
    %v115 = vld [vmem:[#allocation4 + $0x128] sm:$0xff]
    %v116 = vld [vmem:[#allocation4 + $0x130] sm:$0xff]
    %v117 = vld [vmem:[#allocation4 + $0x138] sm:$0xff]
    %v118 = vld [vmem:[#allocation4 + $0x140] sm:$0xff]
    %v119 = vld [vmem:[#allocation4 + $0x148] sm:$0xff]
    %v120 = vld [vmem:[#allocation4 + $0x150] sm:$0xff]
    %v121 = vld [vmem:[#allocation4 + $0x158] sm:$0xff]
    %v122 = vld [vmem:[#allocation4 + $0x160] sm:$0xff]
    %v123 = vld [vmem:[#allocation4 + $0x168] sm:$0xff]
    %v124 = vld [vmem:[#allocation4 + $0x170] sm:$0xff]
    %v125 = vld [vmem:[#allocation4 + $0x178] sm:$0xff]
    %v126 = vld [vmem:[#allocation4 + $0x180] sm:$0xff]
    %v127 = vld [vmem:[#allocation4 + $0x188] sm:$0xff]
    %v128 = vld [vmem:[#allocation4 + $0x190] sm:$0xff]
    %v129 = vld [vmem:[#allocation4 + $0x198] sm:$0xff]
    %v130 = vld [vmem:[#allocation4 + $0x1a0] sm:$0xff]
    %v131 = vld [vmem:[#allocation4 + $0x1a8] sm:$0xff]
    %v132 = vld [vmem:[#allocation4 + $0x1b0] sm:$0xff]
    %v133 = vld [vmem:[#allocation4 + $0x1b8] sm:$0xff]
    %v134 = vld [vmem:[#allocation4 + $0x1c0] sm:$0xff]
    %v135 = vld [vmem:[#allocation4 + $0x1c8] sm:$0xff]
    %v136 = vld [vmem:[#allocation4 + $0x1d0] sm:$0xff]
    %v137 = vld [vmem:[#allocation4 + $0x1d8] sm:$0xff]
    %v138 = vld [vmem:[#allocation4 + $0x1e0] sm:$0xff]
    %v139 = vld [vmem:[#allocation4 + $0x1e8] sm:$0xff]
    %v140 = vld [vmem:[#allocation4 + $0x1f0] sm:$0xff]
    %v141 = vld [vmem:[#allocation4 + $0x1f8] sm:$0xff]
    %v142 = vld [vmem:[#allocation4 + $0x200] sm:$0xff]
    %v143 = vld [vmem:[#allocation4 + $0x208] sm:$0xff]
    %v144 = vld [vmem:[#allocation4 + $0x210] sm:$0xff]
    %v145 = vld [vmem:[#allocation4 + $0x218] sm:$0xff]
    %v146 = vld [vmem:[#allocation4 + $0x220] sm:$0xff]
    %v147 = vld [vmem:[#allocation4 + $0x228] sm:$0xff]
    %v148 = vld [vmem:[#allocation4 + $0x230] sm:$0xff]
    %v149 = vld [vmem:[#allocation4 + $0x238] sm:$0xff]
    %v150 = vld [vmem:[#allocation4 + $0x240] sm:$0xff]
    %v151 = vld [vmem:[#allocation4 + $0x248] sm:$0xff]
    %v152 = vld [vmem:[#allocation4 + $0x250] sm:$0xff]
    %v153 = vld [vmem:[#allocation4 + $0x258] sm:$0xff]
    %v154 = vld [vmem:[#allocation4 + $0x260] sm:$0xff]
    %v155 = vld [vmem:[#allocation4 + $0x268] sm:$0xff]
    %v156 = vld [vmem:[#allocation4 + $0x270] sm:$0xff]
    %v157 = vld [vmem:[#allocation4 + $0x278] sm:$0xff]
    %v158 = vld [vmem:[#allocation4 + $0x280] sm:$0xff]
    %v159 = vld [vmem:[#allocation4 + $0x288] sm:$0xff]
    %v160 = vld [vmem:[#allocation4 + $0x290] sm:$0xff]
    %v161 = vld [vmem:[#allocation4 + $0x298] sm:$0xff]
    %v162 = vld [vmem:[#allocation4 + $0x2a0] sm:$0xff]
    %v163 = vld [vmem:[#allocation4 + $0x2a8] sm:$0xff]
    %v164 = vld [vmem:[#allocation4 + $0x2b0] sm:$0xff]
    %v165 = vld [vmem:[#allocation4 + $0x2b8] sm:$0xff]
    %v166 = vld [vmem:[#allocation4 + $0x2c0] sm:$0xff]
    %v167 = vld [vmem:[#allocation4 + $0x2c8] sm:$0xff]
    %v168 = vld [vmem:[#allocation4 + $0x2d0] sm:$0xff]
    %v169 = vld [vmem:[#allocation4 + $0x2d8] sm:$0xff]
    %v170 = vld [vmem:[#allocation4 + $0x2e0] sm:$0xff]
    %v171 = vld [vmem:[#allocation4 + $0x2e8] sm:$0xff]
    %v172 = vld [vmem:[#allocation4 + $0x2f0] sm:$0xff]
    %v173 = vld [vmem:[#allocation4 + $0x2f8] sm:$0xff]
    %v174 = vld [vmem:[#allocation4 + $0x300] sm:$0xff]
    %v175 = vld [vmem:[#allocation4 + $0x308] sm:$0xff]
    %v176 = vld [vmem:[#allocation4 + $0x310] sm:$0xff]
    %v177 = vld [vmem:[#allocation4 + $0x318] sm:$0xff]
    %v178 = vld [vmem:[#allocation4 + $0x320] sm:$0xff]
    %v179 = vld [vmem:[#allocation4 + $0x328] sm:$0xff]
    %v180 = vld [vmem:[#allocation4 + $0x330] sm:$0xff]
    %v181 = vld [vmem:[#allocation4 + $0x338] sm:$0xff]
    %v182 = vld [vmem:[#allocation4 + $0x340] sm:$0xff]
    %v183 = vld [vmem:[#allocation4 + $0x348] sm:$0xff]
    %v184 = vld [vmem:[#allocation4 + $0x350] sm:$0xff]
    %v185 = vld [vmem:[#allocation4 + $0x358] sm:$0xff]
    %v186 = vld [vmem:[#allocation4 + $0x360] sm:$0xff]
    %v187 = vld [vmem:[#allocation4 + $0x368] sm:$0xff]
    %v188 = vld [vmem:[#allocation4 + $0x370] sm:$0xff]
    %v189 = vld [vmem:[#allocation4 + $0x378] sm:$0xff]
    %v190 = vld [vmem:[#allocation4 + $0x380] sm:$0xff]
    %v191 = vld [vmem:[#allocation4 + $0x388] sm:$0xff]
    %v192 = vld [vmem:[#allocation4 + $0x390] sm:$0xff]
    %v193 = vld [vmem:[#allocation4 + $0x398] sm:$0xff]
    %v194 = vld [vmem:[#allocation4 + $0x3a0] sm:$0xff]
    %v195 = vld [vmem:[#allocation4 + $0x3a8] sm:$0xff]
    %v196 = vld [vmem:[#allocation4 + $0x3b0] sm:$0xff]
    %v197 = vld [vmem:[#allocation4 + $0x3b8] sm:$0xff]
    %v198 = vld [vmem:[#allocation4 + $0x3c0] sm:$0xff]
    %v199 = vld [vmem:[#allocation4 + $0x3c8] sm:$0xff]
    %v200 = vld [vmem:[#allocation4 + $0x3d0] sm:$0xff]
    %v201 = vld [vmem:[#allocation4 + $0x3d8] sm:$0xff]
    %v202 = vld [vmem:[#allocation4 + $0x3e0] sm:$0xff]
    %v203 = vld [vmem:[#allocation4 + $0x3e8] sm:$0xff]
    %v204 = vld [vmem:[#allocation4 + $0x3f0] sm:$0xff]
    %v205 = vld [vmem:[#allocation4 + $0x3f8] sm:$0xff]
    %v206 = vld [vmem:[#allocation4 + $0x400] sm:$0xff]
    %v207 = vld [vmem:[#allocation4 + $0x408] sm:$0xff]
    %v208 = vld [vmem:[#allocation4 + $0x410] sm:$0xff]
    %v209 = vld [vmem:[#allocation4 + $0x418] sm:$0xff]
    %v210 = vld [vmem:[#allocation4 + $0x420] sm:$0xff]
    %v211 = vld [vmem:[#allocation4 + $0x428] sm:$0xff]
    %v212 = vld [vmem:[#allocation4 + $0x430] sm:$0xff]
    %v213 = vld [vmem:[#allocation4 + $0x438] sm:$0xff]
    %v214 = vld [vmem:[#allocation4 + $0x440] sm:$0xff]
    %v215 = vld [vmem:[#allocation4 + $0x448] sm:$0xff]
    %v216 = vld [vmem:[#allocation4 + $0x450] sm:$0xff]
    %v217 = vld [vmem:[#allocation4 + $0x458] sm:$0xff]
    %v218 = vld [vmem:[#allocation4 + $0x460] sm:$0xff]
    %v219 = vld [vmem:[#allocation4 + $0x468] sm:$0xff]
    %v220 = vld [vmem:[#allocation4 + $0x470] sm:$0xff]
    %v221 = vld [vmem:[#allocation4 + $0x478] sm:$0xff]
    %v222 = vld [vmem:[#allocation4 + $0x480] sm:$0xff]
    %v223 = vld [vmem:[#allocation4 + $0x488] sm:$0xff]
    %v224 = vld [vmem:[#allocation4 + $0x490] sm:$0xff]
    %v225 = vld [vmem:[#allocation4 + $0x498] sm:$0xff]
    %v226 = vld [vmem:[#allocation4 + $0x4a0] sm:$0xff]
    %v227 = vld [vmem:[#allocation4 + $0x4a8] sm:$0xff]
    %v228 = vld [vmem:[#allocation4 + $0x4b0] sm:$0xff]
    %v229 = vld [vmem:[#allocation4 + $0x4b8] sm:$0xff]
    %v230 = vld [vmem:[#allocation4 + $0x4c0] sm:$0xff]
    %v231 = vld [vmem:[#allocation4 + $0x4c8] sm:$0xff]
    %v232 = vld [vmem:[#allocation4 + $0x4d0] sm:$0xff]
    %v233 = vld [vmem:[#allocation4 + $0x4d8] sm:$0xff]
    %v234 = vld [vmem:[#allocation4 + $0x4e0] sm:$0xff]
    %v235 = vld [vmem:[#allocation4 + $0x4e8] sm:$0xff]
    %v236 = vld [vmem:[#allocation4 + $0x4f0] sm:$0xff]
    %v237 = vld [vmem:[#allocation4 + $0x4f8] sm:$0xff]
    %v238 = vld [vmem:[#allocation4 + $0x500] sm:$0xff]
    %v239 = vld [vmem:[#allocation4 + $0x508] sm:$0xff]
    %v240 = vld [vmem:[#allocation4 + $0x510] sm:$0xff]
    %v241 = vld [vmem:[#allocation4 + $0x518] sm:$0xff]
    %v242 = vld [vmem:[#allocation4 + $0x520] sm:$0xff]
    %v243 = vld [vmem:[#allocation4 + $0x528] sm:$0xff]
    %v244 = vld [vmem:[#allocation4 + $0x530] sm:$0xff]
    %v245 = vld [vmem:[#allocation4 + $0x538] sm:$0xff]
    %v246 = vld [vmem:[#allocation4 + $0x540] sm:$0xff]
    %v247 = vld [vmem:[#allocation4 + $0x548] sm:$0xff]
    %v248 = vld [vmem:[#allocation4 + $0x550] sm:$0xff]
    %v249 = vld [vmem:[#allocation4 + $0x558] sm:$0xff]
    %v250 = vld [vmem:[#allocation4 + $0x560] sm:$0xff]
    %v251 = vld [vmem:[#allocation4 + $0x568] sm:$0xff]
    %v252 = vld [vmem:[#allocation4 + $0x570] sm:$0xff]
    %v253 = vld [vmem:[#allocation4 + $0x578] sm:$0xff]
    %v254 = vld [vmem:[#allocation4 + $0x580] sm:$0xff]
    %v255 = vld [vmem:[#allocation4 + $0x588] sm:$0xff]
    %v256 = vld [vmem:[#allocation4 + $0x590] sm:$0xff]
    %v257 = vld [vmem:[#allocation4 + $0x598] sm:$0xff]
    %v258 = vld [vmem:[#allocation4 + $0x5a0] sm:$0xff]
    %v259 = vld [vmem:[#allocation4 + $0x5a8] sm:$0xff]
    %v260 = vld [vmem:[#allocation4 + $0x5b0] sm:$0xff]
    %v261 = vld [vmem:[#allocation4 + $0x5b8] sm:$0xff]
    %v262 = vld [vmem:[#allocation4 + $0x5c0] sm:$0xff]
    %v263 = vld [vmem:[#allocation4 + $0x5c8] sm:$0xff]
    %v264 = vld [vmem:[#allocation4 + $0x5d0] sm:$0xff]
    %v265 = vld [vmem:[#allocation4 + $0x5d8] sm:$0xff]
    %v266 = vld [vmem:[#allocation4 + $0x5e0] sm:$0xff]
    %v267 = vld [vmem:[#allocation4 + $0x5e8] sm:$0xff]
    %v268 = vld [vmem:[#allocation4 + $0x5f0] sm:$0xff]
    %v269 = vld [vmem:[#allocation4 + $0x5f8] sm:$0xff]
    %v270 = vld [vmem:[#allocation4 + $0x600] sm:$0xff]
    %v271 = vld [vmem:[#allocation4 + $0x608] sm:$0xff]
    %v272 = vld [vmem:[#allocation4 + $0x610] sm:$0xff]
    %v273 = vld [vmem:[#allocation4 + $0x618] sm:$0xff]
    %v274 = vld [vmem:[#allocation4 + $0x620] sm:$0xff]
    %v275 = vld [vmem:[#allocation4 + $0x628] sm:$0xff]
    %v276 = vld [vmem:[#allocation4 + $0x630] sm:$0xff]
    %v277 = vld [vmem:[#allocation4 + $0x638] sm:$0xff]
    %v278 = vld [vmem:[#allocation4 + $0x640] sm:$0xff]
    %v279 = vld [vmem:[#allocation4 + $0x648] sm:$0xff]
    %v280 = vld [vmem:[#allocation4 + $0x650] sm:$0xff]
    %v281 = vld [vmem:[#allocation4 + $0x658] sm:$0xff]
    %v282 = vld [vmem:[#allocation4 + $0x660] sm:$0xff]
    %v283 = vld [vmem:[#allocation4 + $0x668] sm:$0xff]
    %v284 = vld [vmem:[#allocation4 + $0x670] sm:$0xff]
    %v285 = vld [vmem:[#allocation4 + $0x678] sm:$0xff]
    %v286 = vld [vmem:[#allocation4 + $0x680] sm:$0xff]
    %v287 = vld [vmem:[#allocation4 + $0x688] sm:$0xff]
    %v288 = vld [vmem:[#allocation4 + $0x690] sm:$0xff]
    %v289 = vld [vmem:[#allocation4 + $0x698] sm:$0xff]
    %v290 = vld [vmem:[#allocation4 + $0x6a0] sm:$0xff]
    %v291 = vld [vmem:[#allocation4 + $0x6a8] sm:$0xff]
    %v292 = vld [vmem:[#allocation4 + $0x6b0] sm:$0xff]
    %v293 = vld [vmem:[#allocation4 + $0x6b8] sm:$0xff]
    %v294 = vld [vmem:[#allocation4 + $0x6c0] sm:$0xff]
    %v295 = vld [vmem:[#allocation4 + $0x6c8] sm:$0xff]
    %v296 = vld [vmem:[#allocation4 + $0x6d0] sm:$0xff]
    %v297 = vld [vmem:[#allocation4 + $0x6d8] sm:$0xff]
    %v298 = vld [vmem:[#allocation4 + $0x6e0] sm:$0xff]
    %v299 = vld [vmem:[#allocation4 + $0x6e8] sm:$0xff]
    %v300 = vld [vmem:[#allocation4 + $0x6f0] sm:$0xff]
    %v301 = vld [vmem:[#allocation4 + $0x6f8] sm:$0xff]
    %v302 = vld [vmem:[#allocation4 + $0x700] sm:$0xff]
    %v303 = vld [vmem:[#allocation4 + $0x708] sm:$0xff]
    %v304 = vld [vmem:[#allocation4 + $0x710] sm:$0xff]
    %v305 = vld [vmem:[#allocation4 + $0x718] sm:$0xff]
    %v306 = vld [vmem:[#allocation4 + $0x720] sm:$0xff]
    %v307 = vld [vmem:[#allocation4 + $0x728] sm:$0xff]
    %v308 = vld [vmem:[#allocation4 + $0x730] sm:$0xff]
    %v309 = vld [vmem:[#allocation4 + $0x738] sm:$0xff]
    %v310 = vld [vmem:[#allocation4 + $0x740] sm:$0xff]
    %v311 = vld [vmem:[#allocation4 + $0x748] sm:$0xff]
    %v312 = vld [vmem:[#allocation4 + $0x750] sm:$0xff]
    %v313 = vld [vmem:[#allocation4 + $0x758] sm:$0xff]
    %v314 = vld [vmem:[#allocation4 + $0x760] sm:$0xff]
    %v315 = vld [vmem:[#allocation4 + $0x768] sm:$0xff]
    %v316 = vld [vmem:[#allocation4 + $0x770] sm:$0xff]
    %v317 = vld [vmem:[#allocation4 + $0x778] sm:$0xff]
    %v318 = vld [vmem:[#allocation4 + $0x780] sm:$0xff]
    %v319 = vld [vmem:[#allocation4 + $0x788] sm:$0xff]
    %v320 = vld [vmem:[#allocation4 + $0x790] sm:$0xff]
    %v321 = vld [vmem:[#allocation4 + $0x798] sm:$0xff]
    %v322 = vld [vmem:[#allocation4 + $0x7a0] sm:$0xff]
    %v323 = vld [vmem:[#allocation4 + $0x7a8] sm:$0xff]
    %v324 = vld [vmem:[#allocation4 + $0x7b0] sm:$0xff]
    %v325 = vld [vmem:[#allocation4 + $0x7b8] sm:$0xff]
    %v326 = vld [vmem:[#allocation4 + $0x7c0] sm:$0xff]
    %v327 = vld [vmem:[#allocation4 + $0x7c8] sm:$0xff]
    %v328 = vld [vmem:[#allocation4 + $0x7d0] sm:$0xff]
    %v329 = vld [vmem:[#allocation4 + $0x7d8] sm:$0xff]
    %v330 = vld [vmem:[#allocation4 + $0x7e0] sm:$0xff]
    %v331 = vld [vmem:[#allocation4 + $0x7e8] sm:$0xff]
    %v332 = vld [vmem:[#allocation4 + $0x7f0] sm:$0xff]
    %v333 = vld [vmem:[#allocation4 + $0x7f8] sm:$0xff]
    %v334 = vld [vmem:[#allocation4 + $0x800] sm:$0xff]
    %v335 = vld [vmem:[#allocation4 + $0x808] sm:$0xff]
    %v336 = vld [vmem:[#allocation4 + $0x810] sm:$0xff]
    %v337 = vld [vmem:[#allocation4 + $0x818] sm:$0xff]
    %v338 = vld [vmem:[#allocation4 + $0x820] sm:$0xff]
    %v339 = vld [vmem:[#allocation4 + $0x828] sm:$0xff]
    %v340 = vld [vmem:[#allocation4 + $0x830] sm:$0xff]
    %v341 = vld [vmem:[#allocation4 + $0x838] sm:$0xff]
    %v342 = vld [vmem:[#allocation4 + $0x840] sm:$0xff]
    %v343 = vld [vmem:[#allocation4 + $0x848] sm:$0xff]
    %v344 = vld [vmem:[#allocation4 + $0x850] sm:$0xff]
    %v345 = vld [vmem:[#allocation4 + $0x858] sm:$0xff]
    %v346 = vld [vmem:[#allocation4 + $0x860] sm:$0xff]
    %v347 = vld [vmem:[#allocation4 + $0x868] sm:$0xff]
    %v348 = vld [vmem:[#allocation4 + $0x870] sm:$0xff]
    %v349 = vld [vmem:[#allocation4 + $0x878] sm:$0xff]
    %v350 = vld [vmem:[#allocation4 + $0x880] sm:$0xff]
    %v351 = vld [vmem:[#allocation4 + $0x888] sm:$0xff]
    %v352 = vld [vmem:[#allocation4 + $0x890] sm:$0xff]
    %v353 = vld [vmem:[#allocation4 + $0x898] sm:$0xff]
    %v354 = vld [vmem:[#allocation4 + $0x8a0] sm:$0xff]
    %v355 = vld [vmem:[#allocation4 + $0x8a8] sm:$0xff]
    %v356 = vld [vmem:[#allocation4 + $0x8b0] sm:$0xff]
    %v357 = vld [vmem:[#allocation4 + $0x8b8] sm:$0xff]
    %v358 = vld [vmem:[#allocation4 + $0x8c0] sm:$0xff]
    %v359 = vld [vmem:[#allocation4 + $0x8c8] sm:$0xff]
    %v360 = vld [vmem:[#allocation4 + $0x8d0] sm:$0xff]
    %v361 = vld [vmem:[#allocation4 + $0x8d8] sm:$0xff]
    %v362 = vld [vmem:[#allocation4 + $0x8e0] sm:$0xff]
    %v363 = vld [vmem:[#allocation4 + $0x8e8] sm:$0xff]
    %v364 = vld [vmem:[#allocation4 + $0x8f0] sm:$0xff]
    %v365 = vld [vmem:[#allocation4 + $0x8f8] sm:$0xff]
    %v366 = vld [vmem:[#allocation4 + $0x900] sm:$0xff]
    %v367 = vld [vmem:[#allocation4 + $0x908] sm:$0xff]
    %v368 = vld [vmem:[#allocation4 + $0x910] sm:$0xff]
    %v369 = vld [vmem:[#allocation4 + $0x918] sm:$0xff]
    %v370 = vld [vmem:[#allocation4 + $0x920] sm:$0xff]
    %v371 = vld [vmem:[#allocation4 + $0x928] sm:$0xff]
    %v372 = vld [vmem:[#allocation4 + $0x930] sm:$0xff]
    %v373 = vld [vmem:[#allocation4 + $0x938] sm:$0xff]
    %v374 = vld [vmem:[#allocation4 + $0x940] sm:$0xff]
    %v375 = vld [vmem:[#allocation4 + $0x948] sm:$0xff]
    %v376 = vld [vmem:[#allocation4 + $0x950] sm:$0xff]
    %v377 = vld [vmem:[#allocation4 + $0x958] sm:$0xff]
    %v378 = vld [vmem:[#allocation4 + $0x960] sm:$0xff]
    %v379 = vld [vmem:[#allocation4 + $0x968] sm:$0xff]
    %v380 = vld [vmem:[#allocation4 + $0x970] sm:$0xff]
    %v381 = vld [vmem:[#allocation4 + $0x978] sm:$0xff]
    %v382 = vld [vmem:[#allocation4 + $0x980] sm:$0xff]
    %v383 = vld [vmem:[#allocation4 + $0x988] sm:$0xff]
    %v384 = vld [vmem:[#allocation4 + $0x990] sm:$0xff]
    %v385 = vld [vmem:[#allocation4 + $0x998] sm:$0xff]
    %v386 = vld [vmem:[#allocation4 + $0x9a0] sm:$0xff]
    %v387 = vld [vmem:[#allocation4 + $0x9a8] sm:$0xff]
    %v388 = vld [vmem:[#allocation4 + $0x9b0] sm:$0xff]
    %v389 = vld [vmem:[#allocation4 + $0x9b8] sm:$0xff]
    %v390 = vld [vmem:[#allocation4 + $0x9c0] sm:$0xff]
    %v391 = vld [vmem:[#allocation4 + $0x9c8] sm:$0xff]
    %v392 = vld [vmem:[#allocation4 + $0x9d0] sm:$0xff]
    %v393 = vld [vmem:[#allocation4 + $0x9d8] sm:$0xff]
    %v394 = vld [vmem:[#allocation4 + $0x9e0] sm:$0xff]
    %v395 = vld [vmem:[#allocation4 + $0x9e8] sm:$0xff]
    %v396 = vld [vmem:[#allocation4 + $0x9f0] sm:$0xff]
    %v397 = vld [vmem:[#allocation4 + $0x9f8] sm:$0xff]
    %398 = vmatprep.subr.mxu0 %v79
    %399 = vmatpush1.msra.mxu0 %v78
    %400 = vmatprep.subr.mxu0 %v84
    %401 = vmatpush1.msra.mxu0 %v83
    %402 = vmatprep.subr.mxu0 %v89
    %403 = vmatpush1.msra.mxu0 %v88
    %404 = vmatprep.subr.mxu0 %v94
    %405 = vmatpush1.msra.mxu0 %v93
    %406 = vmatprep.subr.mxu0 %v99
    %407 = vmatpush1.msra.mxu0 %v98
    %408 = vmatprep.subr.mxu0 %v104
    %409 = vmatpush1.msra.mxu0 %v103
    %410 = vmatprep.subr.mxu0 %v109
    %411 = vmatpush1.msra.mxu0 %v108
    %412 = vmatprep.subr.mxu0 %v114
    %413 = vmatpush1.msra.mxu0 %v113
    %414 = vmatprep.subr.mxu0 %v119
    %415 = vmatpush1.msra.mxu0 %v118
    %416 = vmatprep.subr.mxu0 %v124
    %417 = vmatpush1.msra.mxu0 %v123
    %418 = vmatprep.subr.mxu0 %v129
    %419 = vmatpush1.msra.mxu0 %v128
    %420 = vmatprep.subr.mxu0 %v134
    %421 = vmatpush1.msra.mxu0 %v133
    %422 = vmatprep.subr.mxu0 %v139
    %423 = vmatpush1.msra.mxu0 %v138
    %424 = vmatprep.subr.mxu0 %v144
    %425 = vmatpush1.msra.mxu0 %v143
    %426 = vmatprep.subr.mxu0 %v149
    %427 = vmatpush1.msra.mxu0 %v148
    %428 = vmatprep.subr.mxu0 %v154
    %429 = vmatpush1.msra.mxu0 %v153
    %430 = vmatprep.subr.mxu0 %v159
    %431 = vmatpush1.msra.mxu0 %v158
    %432 = vmatprep.subr.mxu0 %v164
    %433 = vmatpush1.msra.mxu0 %v163
    %434 = vmatprep.subr.mxu0 %v169
    %435 = vmatpush1.msra.mxu0 %v168
    %436 = vmatprep.subr.mxu0 %v174
    %437 = vmatpush1.msra.mxu0 %v173
    %438 = vmatprep.subr.mxu0 %v179
    %439 = vmatpush1.msra.mxu0 %v178
    %440 = vmatprep.subr.mxu0 %v184
    %441 = vmatpush1.msra.mxu0 %v183
    %442 = vmatprep.subr.mxu0 %v189
    %443 = vmatpush1.msra.mxu0 %v188
    %444 = vmatprep.subr.mxu0 %v194
    %445 = vmatpush1.msra.mxu0 %v193
    %446 = vmatprep.subr.mxu0 %v199
    %447 = vmatpush1.msra.mxu0 %v198
    %448 = vmatprep.subr.mxu0 %v204
    %449 = vmatpush1.msra.mxu0 %v203
    %450 = vmatprep.subr.mxu0 %v209
    %451 = vmatpush1.msra.mxu0 %v208
    %452 = vmatprep.subr.mxu0 %v214
    %453 = vmatpush1.msra.mxu0 %v213
    %454 = vmatprep.subr.mxu0 %v219
    %455 = vmatpush1.msra.mxu0 %v218
    %456 = vmatprep.subr.mxu0 %v224
    %457 = vmatpush1.msra.mxu0 %v223
    %458 = vmatprep.subr.mxu0 %v229
    %459 = vmatpush1.msra.mxu0 %v228
    %460 = vmatprep.subr.mxu0 %v234
    %461 = vmatpush1.msra.mxu0 %v233
    %462 = vmatprep.mubr.f32.mxu0 %v75
    %463 = vmatmul.mubr.f32.gmra.mrb[0].mxu0 %v74
    %v464 = vpop.f32.mrb[0].mxu0
    %v465 = vadd.f32 0.0, %v464
    %v466 = vpop.f32.mrb[0].mxu0
    %v467 = vadd.f32 0.0, %v466
    %468 = vdwg.mxu0
    %469 = vmatprep.subr.mxu0 %v239
    %470 = vmatpush1.msra.mxu0 %v238
    %471 = vmatprep.subr.mxu0 %v244
    %472 = vmatpush1.msra.mxu0 %v243
    %473 = vmatprep.subr.mxu0 %v249
    %474 = vmatpush1.msra.mxu0 %v248
    %475 = vmatprep.subr.mxu0 %v254
    %476 = vmatpush1.msra.mxu0 %v253
    %477 = vmatprep.subr.mxu0 %v259
    %478 = vmatpush1.msra.mxu0 %v258
    %479 = vmatprep.subr.mxu0 %v264
    %480 = vmatpush1.msra.mxu0 %v263
    %481 = vmatprep.subr.mxu0 %v269
    %482 = vmatpush1.msra.mxu0 %v268
    %483 = vmatprep.subr.mxu0 %v274
    %484 = vmatpush1.msra.mxu0 %v273
    %485 = vmatprep.subr.mxu0 %v279
    %486 = vmatpush1.msra.mxu0 %v278
    %487 = vmatprep.subr.mxu0 %v284
    %488 = vmatpush1.msra.mxu0 %v283
    %489 = vmatprep.subr.mxu0 %v289
    %490 = vmatpush1.msra.mxu0 %v288
    %491 = vmatprep.subr.mxu0 %v294
    %492 = vmatpush1.msra.mxu0 %v293
    %493 = vmatprep.subr.mxu0 %v299
    %494 = vmatpush1.msra.mxu0 %v298
    %495 = vmatprep.subr.mxu0 %v304
    %496 = vmatpush1.msra.mxu0 %v303
    %497 = vmatprep.subr.mxu0 %v309
    %498 = vmatpush1.msra.mxu0 %v308
    %499 = vmatprep.subr.mxu0 %v314
    %500 = vmatpush1.msra.mxu0 %v313
    %501 = vmatprep.subr.mxu0 %v319
    %502 = vmatpush1.msra.mxu0 %v318
    %503 = vmatprep.subr.mxu0 %v324
    %504 = vmatpush1.msra.mxu0 %v323
    %505 = vmatprep.subr.mxu0 %v329
    %506 = vmatpush1.msra.mxu0 %v328
    %507 = vmatprep.subr.mxu0 %v334
    %508 = vmatpush1.msra.mxu0 %v333
    %509 = vmatprep.subr.mxu0 %v339
    %510 = vmatpush1.msra.mxu0 %v338
    %511 = vmatprep.subr.mxu0 %v344
    %512 = vmatpush1.msra.mxu0 %v343
    %513 = vmatprep.subr.mxu0 %v349
    %514 = vmatpush1.msra.mxu0 %v348
    %515 = vmatprep.subr.mxu0 %v354
    %516 = vmatpush1.msra.mxu0 %v353
    %517 = vmatprep.subr.mxu0 %v359
    %518 = vmatpush1.msra.mxu0 %v358
    %519 = vmatprep.subr.mxu0 %v364
    %520 = vmatpush1.msra.mxu0 %v363
    %521 = vmatprep.subr.mxu0 %v369
    %522 = vmatpush1.msra.mxu0 %v368
    %523 = vmatprep.subr.mxu0 %v374
    %524 = vmatpush1.msra.mxu0 %v373
    %525 = vmatprep.subr.mxu0 %v379
    %526 = vmatpush1.msra.mxu0 %v378
    %527 = vmatprep.subr.mxu0 %v384
    %528 = vmatpush1.msra.mxu0 %v383
    %529 = vmatprep.subr.mxu0 %v389
    %530 = vmatpush1.msra.mxu0 %v388
    %531 = vmatprep.subr.mxu0 %v394
    %532 = vmatpush1.msra.mxu0 %v393
    %533 = vmatprep.mubr.f32.mxu0 %v77
    %534 = vmatmul.mubr.f32.gmra.mrb[0].mxu0 %v76
    %v535 = vpop.f32.mrb[0].mxu0
    %v536 = vadd.f32 %v465, %v535
    %v537 = vpop.f32.mrb[0].mxu0
    %v538 = vadd.f32 %v467, %v537
    %539 = vdwg.mxu0
    %540 = vmatprep.subr.mxu0 %v81
    %541 = vmatpush1.msra.mxu0 %v80
    %542 = vmatprep.subr.mxu0 %v86
    %543 = vmatpush1.msra.mxu0 %v85
    %544 = vmatprep.subr.mxu0 %v91
    %545 = vmatpush1.msra.mxu0 %v90
    %546 = vmatprep.subr.mxu0 %v96
    %547 = vmatpush1.msra.mxu0 %v95
    %548 = vmatprep.subr.mxu0 %v101
    %549 = vmatpush1.msra.mxu0 %v100
    %550 = vmatprep.subr.mxu0 %v106
    %551 = vmatpush1.msra.mxu0 %v105
    %552 = vmatprep.subr.mxu0 %v111
    %553 = vmatpush1.msra.mxu0 %v110
    %554 = vmatprep.subr.mxu0 %v116
    %555 = vmatpush1.msra.mxu0 %v115
    %556 = vmatprep.subr.mxu0 %v121
    %557 = vmatpush1.msra.mxu0 %v120
    %558 = vmatprep.subr.mxu0 %v126
    %559 = vmatpush1.msra.mxu0 %v125
    %560 = vmatprep.subr.mxu0 %v131
    %561 = vmatpush1.msra.mxu0 %v130
    %562 = vmatprep.subr.mxu0 %v136
    %563 = vmatpush1.msra.mxu0 %v135
    %564 = vmatprep.subr.mxu0 %v141
    %565 = vmatpush1.msra.mxu0 %v140
    %566 = vmatprep.subr.mxu0 %v146
    %567 = vmatpush1.msra.mxu0 %v145
    %568 = vmatprep.subr.mxu0 %v151
    %569 = vmatpush1.msra.mxu0 %v150
    %570 = vmatprep.subr.mxu0 %v156
    %571 = vmatpush1.msra.mxu0 %v155
    %572 = vmatprep.subr.mxu0 %v161
    %573 = vmatpush1.msra.mxu0 %v160
    %574 = vmatprep.subr.mxu0 %v166
    %575 = vmatpush1.msra.mxu0 %v165
    %576 = vmatprep.subr.mxu0 %v171
    %577 = vmatpush1.msra.mxu0 %v170
    %578 = vmatprep.subr.mxu0 %v176
    %579 = vmatpush1.msra.mxu0 %v175
    %580 = vmatprep.subr.mxu0 %v181
    %581 = vmatpush1.msra.mxu0 %v180
    %582 = vmatprep.subr.mxu0 %v186
    %583 = vmatpush1.msra.mxu0 %v185
    %584 = vmatprep.subr.mxu0 %v191
    %585 = vmatpush1.msra.mxu0 %v190
    %586 = vmatprep.subr.mxu0 %v196
    %587 = vmatpush1.msra.mxu0 %v195
    %588 = vmatprep.subr.mxu0 %v201
    %589 = vmatpush1.msra.mxu0 %v200
    %590 = vmatprep.subr.mxu0 %v206
    %591 = vmatpush1.msra.mxu0 %v205
    %592 = vmatprep.subr.mxu0 %v211
    %593 = vmatpush1.msra.mxu0 %v210
    %594 = vmatprep.subr.mxu0 %v216
    %595 = vmatpush1.msra.mxu0 %v215
    %596 = vmatprep.subr.mxu0 %v221
    %597 = vmatpush1.msra.mxu0 %v220
    %598 = vmatprep.subr.mxu0 %v226
    %599 = vmatpush1.msra.mxu0 %v225
    %600 = vmatprep.subr.mxu0 %v231
    %601 = vmatpush1.msra.mxu0 %v230
    %602 = vmatprep.subr.mxu0 %v236
    %603 = vmatpush1.msra.mxu0 %v235
    %604 = vmatprep.mubr.f32.mxu0 %v75
    %605 = vmatmul.mubr.f32.gmra.mrb[0].mxu0 %v74
    %v606 = vpop.f32.mrb[0].mxu0
    %v607 = vadd.f32 0.0, %v606
    %v608 = vpop.f32.mrb[0].mxu0
    %v609 = vadd.f32 0.0, %v608
    %610 = vdwg.mxu0
    %611 = vmatprep.subr.mxu0 %v241
    %612 = vmatpush1.msra.mxu0 %v240
    %613 = vmatprep.subr.mxu0 %v246
    %614 = vmatpush1.msra.mxu0 %v245
    %615 = vmatprep.subr.mxu0 %v251
    %616 = vmatpush1.msra.mxu0 %v250
    %617 = vmatprep.subr.mxu0 %v256
    %618 = vmatpush1.msra.mxu0 %v255
    %619 = vmatprep.subr.mxu0 %v261
    %620 = vmatpush1.msra.mxu0 %v260
    %621 = vmatprep.subr.mxu0 %v266
    %622 = vmatpush1.msra.mxu0 %v265
    %623 = vmatprep.subr.mxu0 %v271
    %624 = vmatpush1.msra.mxu0 %v270
    %625 = vmatprep.subr.mxu0 %v276
    %626 = vmatpush1.msra.mxu0 %v275
    %627 = vmatprep.subr.mxu0 %v281
    %628 = vmatpush1.msra.mxu0 %v280
    %629 = vmatprep.subr.mxu0 %v286
    %630 = vmatpush1.msra.mxu0 %v285
    %631 = vmatprep.subr.mxu0 %v291
    %632 = vmatpush1.msra.mxu0 %v290
    %633 = vmatprep.subr.mxu0 %v296
    %634 = vmatpush1.msra.mxu0 %v295
    %635 = vmatprep.subr.mxu0 %v301
    %636 = vmatpush1.msra.mxu0 %v300
    %637 = vmatprep.subr.mxu0 %v306
    %638 = vmatpush1.msra.mxu0 %v305
    %639 = vmatprep.subr.mxu0 %v311
    %640 = vmatpush1.msra.mxu0 %v310
    %641 = vmatprep.subr.mxu0 %v316
    %642 = vmatpush1.msra.mxu0 %v315
    %643 = vmatprep.subr.mxu0 %v321
    %644 = vmatpush1.msra.mxu0 %v320
    %645 = vmatprep.subr.mxu0 %v326
    %646 = vmatpush1.msra.mxu0 %v325
    %647 = vmatprep.subr.mxu0 %v331
    %648 = vmatpush1.msra.mxu0 %v330
    %649 = vmatprep.subr.mxu0 %v336
    %650 = vmatpush1.msra.mxu0 %v335
    %651 = vmatprep.subr.mxu0 %v341
    %652 = vmatpush1.msra.mxu0 %v340
    %653 = vmatprep.subr.mxu0 %v346
    %654 = vmatpush1.msra.mxu0 %v345
    %655 = vmatprep.subr.mxu0 %v351
    %656 = vmatpush1.msra.mxu0 %v350
    %657 = vmatprep.subr.mxu0 %v356
    %658 = vmatpush1.msra.mxu0 %v355
    %659 = vmatprep.subr.mxu0 %v361
    %660 = vmatpush1.msra.mxu0 %v360
    %661 = vmatprep.subr.mxu0 %v366
    %662 = vmatpush1.msra.mxu0 %v365
    %663 = vmatprep.subr.mxu0 %v371
    %664 = vmatpush1.msra.mxu0 %v370
    %665 = vmatprep.subr.mxu0 %v376
    %666 = vmatpush1.msra.mxu0 %v375
    %667 = vmatprep.subr.mxu0 %v381
    %668 = vmatpush1.msra.mxu0 %v380
    %669 = vmatprep.subr.mxu0 %v386
    %670 = vmatpush1.msra.mxu0 %v385
    %671 = vmatprep.subr.mxu0 %v391
    %672 = vmatpush1.msra.mxu0 %v390
    %673 = vmatprep.subr.mxu0 %v396
    %674 = vmatpush1.msra.mxu0 %v395
    %675 = vmatprep.mubr.f32.mxu0 %v77
    %676 = vmatmul.mubr.f32.gmra.mrb[0].mxu0 %v76
    %v677 = vpop.f32.mrb[0].mxu0
    %v678 = vadd.f32 %v607, %v677
    %v679 = vpop.f32.mrb[0].mxu0
    %v680 = vadd.f32 %v609, %v679
    %681 = vdwg.mxu0
    %682 = vmatprep.subr.mxu0 0.0
    %683 = vmatpush1.msra.mxu0 %v82
    %684 = vmatprep.subr.mxu0 0.0
    %685 = vmatpush1.msra.mxu0 %v87
    %686 = vmatprep.subr.mxu0 0.0
    %687 = vmatpush1.msra.mxu0 %v92
    %688 = vmatprep.subr.mxu0 0.0
    %689 = vmatpush1.msra.mxu0 %v97
    %690 = vmatprep.subr.mxu0 0.0
    %691 = vmatpush1.msra.mxu0 %v102
    %692 = vmatprep.subr.mxu0 0.0
    %693 = vmatpush1.msra.mxu0 %v107
    %694 = vmatprep.subr.mxu0 0.0
    %695 = vmatpush1.msra.mxu0 %v112
    %696 = vmatprep.subr.mxu0 0.0
    %697 = vmatpush1.msra.mxu0 %v117
    %698 = vmatprep.subr.mxu0 0.0
    %699 = vmatpush1.msra.mxu0 %v122
    %700 = vmatprep.subr.mxu0 0.0
    %701 = vmatpush1.msra.mxu0 %v127
    %702 = vmatprep.subr.mxu0 0.0
    %703 = vmatpush1.msra.mxu0 %v132
    %704 = vmatprep.subr.mxu0 0.0
    %705 = vmatpush1.msra.mxu0 %v137
    %706 = vmatprep.subr.mxu0 0.0
    %707 = vmatpush1.msra.mxu0 %v142
    %708 = vmatprep.subr.mxu0 0.0
    %709 = vmatpush1.msra.mxu0 %v147
    %710 = vmatprep.subr.mxu0 0.0
    %711 = vmatpush1.msra.mxu0 %v152
    %712 = vmatprep.subr.mxu0 0.0
    %713 = vmatpush1.msra.mxu0 %v157
    %714 = vmatprep.subr.mxu0 0.0
    %715 = vmatpush1.msra.mxu0 %v162
    %716 = vmatprep.subr.mxu0 0.0
    %717 = vmatpush1.msra.mxu0 %v167
    %718 = vmatprep.subr.mxu0 0.0
    %719 = vmatpush1.msra.mxu0 %v172
    %720 = vmatprep.subr.mxu0 0.0
    %721 = vmatpush1.msra.mxu0 %v177
    %722 = vmatprep.subr.mxu0 0.0
    %723 = vmatpush1.msra.mxu0 %v182
    %724 = vmatprep.subr.mxu0 0.0
    %725 = vmatpush1.msra.mxu0 %v187
    %726 = vmatprep.subr.mxu0 0.0
    %727 = vmatpush1.msra.mxu0 %v192
    %728 = vmatprep.subr.mxu0 0.0
    %729 = vmatpush1.msra.mxu0 %v197
    %730 = vmatprep.subr.mxu0 0.0
    %731 = vmatpush1.msra.mxu0 %v202
    %732 = vmatprep.subr.mxu0 0.0
    %733 = vmatpush1.msra.mxu0 %v207
    %734 = vmatprep.subr.mxu0 0.0
    %735 = vmatpush1.msra.mxu0 %v212
    %736 = vmatprep.subr.mxu0 0.0
    %737 = vmatpush1.msra.mxu0 %v217
    %738 = vmatprep.subr.mxu0 0.0
    %739 = vmatpush1.msra.mxu0 %v222
    %740 = vmatprep.subr.mxu0 0.0
    %741 = vmatpush1.msra.mxu0 %v227
    %742 = vmatprep.subr.mxu0 0.0
    %743 = vmatpush1.msra.mxu0 %v232
    %744 = vmatprep.subr.mxu0 0.0
    %745 = vmatpush1.msra.mxu0 %v237
    %746 = vmatprep.mubr.f32.mxu0 %v75
    %747 = vmatmul.mubr.f32.gmra.mrb[0].mxu0 %v74
    %v748 = vpop.f32.mrb[0].mxu0
    %v749 = vadd.f32 0.0, %v748
    %v750 = vpop.f32.mrb[0].mxu0
    %751 = vdwg.mxu0
    %752 = vmatprep.subr.mxu0 0.0
    %753 = vmatpush1.msra.mxu0 %v242
    %754 = vmatprep.subr.mxu0 0.0
    %755 = vmatpush1.msra.mxu0 %v247
    %756 = vmatprep.subr.mxu0 0.0
    %757 = vmatpush1.msra.mxu0 %v252
    %758 = vmatprep.subr.mxu0 0.0
    %759 = vmatpush1.msra.mxu0 %v257
    %760 = vmatprep.subr.mxu0 0.0
    %761 = vmatpush1.msra.mxu0 %v262
    %762 = vmatprep.subr.mxu0 0.0
    %763 = vmatpush1.msra.mxu0 %v267
    %764 = vmatprep.subr.mxu0 0.0
    %765 = vmatpush1.msra.mxu0 %v272
    %766 = vmatprep.subr.mxu0 0.0
    %767 = vmatpush1.msra.mxu0 %v277
    %768 = vmatprep.subr.mxu0 0.0
    %769 = vmatpush1.msra.mxu0 %v282
    %770 = vmatprep.subr.mxu0 0.0
    %771 = vmatpush1.msra.mxu0 %v287
    %772 = vmatprep.subr.mxu0 0.0
    %773 = vmatpush1.msra.mxu0 %v292
    %774 = vmatprep.subr.mxu0 0.0
    %775 = vmatpush1.msra.mxu0 %v297
    %776 = vmatprep.subr.mxu0 0.0
    %777 = vmatpush1.msra.mxu0 %v302
    %778 = vmatprep.subr.mxu0 0.0
    %779 = vmatpush1.msra.mxu0 %v307
    %780 = vmatprep.subr.mxu0 0.0
    %781 = vmatpush1.msra.mxu0 %v312
    %782 = vmatprep.subr.mxu0 0.0
    %783 = vmatpush1.msra.mxu0 %v317
    %784 = vmatprep.subr.mxu0 0.0
    %785 = vmatpush1.msra.mxu0 %v322
    %786 = vmatprep.subr.mxu0 0.0
    %787 = vmatpush1.msra.mxu0 %v327
    %788 = vmatprep.subr.mxu0 0.0
    %789 = vmatpush1.msra.mxu0 %v332
    %790 = vmatprep.subr.mxu0 0.0
    %791 = vmatpush1.msra.mxu0 %v337
    %792 = vmatprep.subr.mxu0 0.0
    %793 = vmatpush1.msra.mxu0 %v342
    %794 = vmatprep.subr.mxu0 0.0
    %795 = vmatpush1.msra.mxu0 %v347
    %796 = vmatprep.subr.mxu0 0.0
    %797 = vmatpush1.msra.mxu0 %v352
    %798 = vmatprep.subr.mxu0 0.0
    %799 = vmatpush1.msra.mxu0 %v357
    %800 = vmatprep.subr.mxu0 0.0
    %801 = vmatpush1.msra.mxu0 %v362
    %802 = vmatprep.subr.mxu0 0.0
    %803 = vmatpush1.msra.mxu0 %v367
    %804 = vmatprep.subr.mxu0 0.0
    %805 = vmatpush1.msra.mxu0 %v372
    %806 = vmatprep.subr.mxu0 0.0
    %807 = vmatpush1.msra.mxu0 %v377
    %808 = vmatprep.subr.mxu0 0.0
    %809 = vmatpush1.msra.mxu0 %v382
    %810 = vmatprep.subr.mxu0 0.0
    %811 = vmatpush1.msra.mxu0 %v387
    %812 = vmatprep.subr.mxu0 0.0
    %813 = vmatpush1.msra.mxu0 %v392
    %814 = vmatprep.subr.mxu0 0.0
    %815 = vmatpush1.msra.mxu0 %v397
    %816 = vmatprep.mubr.f32.mxu0 %v77
    %817 = vmatmul.mubr.f32.gmra.mrb[0].mxu0 %v76
    %v818 = vpop.f32.mrb[0].mxu0
    %v819 = vadd.f32 %v749, %v818
    %v820 = vpop.f32.mrb[0].mxu0
    %821 = vdwg.mxu0
    %v822 = vadd.f32 %v536, %v538
    %v823 = vadd.f32 %v822, %v678
    %v824 = vadd.f32 %v823, %v680
    %v825 = vadd.f32 %v824, %v819
    %826 = vadd.xlane.f32.xlu0 %v825
    %v827 = vpop.xlane.xlu0 %826
    %v828 = vrcp.pop 640.0
    %v829 = vmul.f32 %v827, %v828
    %v830 = vsub.f32 %v536, %v829
    %v831 = vsub.f32 %v538, %v829
    %v832 = vsub.f32 %v678, %v829
    %v833 = vsub.f32 %v680, %v829
    %v834 = vsub.f32 %v819, %v829
    %v835 = vmul.f32 %v830, %v830
    %v836 = vmul.f32 %v831, %v831
    %v837 = vmul.f32 %v832, %v832
    %v838 = vmul.f32 %v833, %v833
    %v839 = vmul.f32 %v834, %v834
    %v840 = vadd.f32 %v835, %v836
    %v841 = vadd.f32 %v840, %v837
    %v842 = vadd.f32 %v841, %v838
    %v843 = vadd.f32 %v842, %v839
    %844 = vadd.xlane.f32.xlu0 %v843
    %v845 = vpop.xlane.xlu0 %844
    %v846 = vmul.f32 %v845, %v828
    %v847 = vadd.f32 %v846, 1e-05
    %v848 = vrsqrt.pop %v847
    %v849 = vmul.f32 %v830, %v848
    %v850 = vmul.f32 %v831, %v848
    %v851 = vmul.f32 %v832, %v848
    %v852 = vmul.f32 %v833, %v848
    %v853 = vmul.f32 %v834, %v848
    %v854 = vld [vmem:[%s2] sm:$0x1f]
    %v856 = vlaneseq
    %v857 = vshrl.u32 %v856, 7
    %v858 = vsub.s32 0, %v857
    %v859 = vrot.slane %v854, %v858
    %v860 = vlaneseq
    %v861 = vshrl.u32 %v860, 7
    %v862 = vsub.s32 1, %v861
    %v863 = vrot.slane %v854, %v862
    %v864 = vlaneseq
    %v865 = vshrl.u32 %v864, 7
    %v866 = vsub.s32 2, %v865
    %v867 = vrot.slane %v854, %v866
    %v868 = vlaneseq
    %v869 = vshrl.u32 %v868, 7
    %v870 = vsub.s32 3, %v869
    %v871 = vrot.slane %v854, %v870
    %v872 = vlaneseq
    %v873 = vshrl.u32 %v872, 7
    %v874 = vsub.s32 4, %v873
    %v875 = vrot.slane %v854, %v874
    %v881 = vmul.f32 %v849, %v859
    %v882 = vmul.f32 %v850, %v863
    %v883 = vmul.f32 %v851, %v867
    %v884 = vmul.f32 %v852, %v871
    %v885 = vmul.f32 %v853, %v875
    %v886 = vld [vmem:[%s3] sm:$0x1f]
    %v888 = vlaneseq
    %v889 = vshrl.u32 %v888, 7
    %v890 = vsub.s32 0, %v889
    %v891 = vrot.slane %v886, %v890
    %v892 = vlaneseq
    %v893 = vshrl.u32 %v892, 7
    %v894 = vsub.s32 1, %v893
    %v895 = vrot.slane %v886, %v894
    %v896 = vlaneseq
    %v897 = vshrl.u32 %v896, 7
    %v898 = vsub.s32 2, %v897
    %v899 = vrot.slane %v886, %v898
    %v900 = vlaneseq
    %v901 = vshrl.u32 %v900, 7
    %v902 = vsub.s32 3, %v901
    %v903 = vrot.slane %v886, %v902
    %v904 = vlaneseq
    %v905 = vshrl.u32 %v904, 7
    %v906 = vsub.s32 4, %v905
    %v907 = vrot.slane %v886, %v906
    %v913 = vadd.f32 %v881, %v891
    %v914 = vadd.f32 %v882, %v895
    %v915 = vadd.f32 %v883, %v899
    %v916 = vadd.f32 %v884, %v903
    %v917 = vadd.f32 %v885, %v907
    %v918 = vxor.u32 %v913, 2147483648
    %v919 = vxor.u32 %v914, 2147483648
    %v920 = vxor.u32 %v915, 2147483648
    %v921 = vxor.u32 %v916, 2147483648
    %v922 = vxor.u32 %v917, 2147483648
    %v923 = vmul.f32 %v918, 1.442695
    %v924 = vpow.pop %v923
    %v925 = vmul.f32 %v919, 1.442695
    %v926 = vpow.pop %v925
    %v927 = vmul.f32 %v920, 1.442695
    %v928 = vpow.pop %v927
    %v929 = vmul.f32 %v921, 1.442695
    %v930 = vpow.pop %v929
    %v931 = vmul.f32 %v922, 1.442695
    %v932 = vpow.pop %v931
    %v933 = vadd.f32 %v924, 1.0
    %v934 = vadd.f32 %v926, 1.0
    %v935 = vadd.f32 %v928, 1.0
    %v936 = vadd.f32 %v930, 1.0
    %v937 = vadd.f32 %v932, 1.0
    %v938 = vrcp.pop %v933
    %v939 = vmul.f32 1.0, %v938
    %v940 = vrcp.pop %v934
    %v941 = vmul.f32 1.0, %v940
    %v942 = vrcp.pop %v935
    %v943 = vmul.f32 1.0, %v942
    %v944 = vrcp.pop %v936
    %v945 = vmul.f32 1.0, %v944
    %v946 = vrcp.pop %v937
    %v947 = vmul.f32 1.0, %v946
    %v948 = vmul.f32 %v913, %v939
    %v949 = vmul.f32 %v914, %v941
    %v950 = vmul.f32 %v915, %v943
    %v951 = vmul.f32 %v916, %v945
    %v952 = vmul.f32 %v917, %v947
    %v953 = vld [vmem:[#allocation6] sm:$0xff]
    %v954 = vld [vmem:[#allocation6 + $0x8] sm:$0xff]
    %v955 = vld [vmem:[#allocation6 + $0x10] sm:$0xff]
    %v956 = vld [vmem:[#allocation6 + $0x18] sm:$0xff]
    %v957 = vld [vmem:[#allocation6 + $0x20] sm:$0xff]
    %v958 = vld [vmem:[#allocation6 + $0x28] sm:$0xff]
    %v959 = vld [vmem:[#allocation6 + $0x30] sm:$0xff]
    %v960 = vld [vmem:[#allocation6 + $0x38] sm:$0xff]
    %v961 = vld [vmem:[#allocation6 + $0x40] sm:$0xff]
    %v962 = vld [vmem:[#allocation6 + $0x48] sm:$0xff]
    %v963 = vld [vmem:[#allocation6 + $0x50] sm:$0xff]
    %v964 = vld [vmem:[#allocation6 + $0x58] sm:$0xff]
    %v965 = vld [vmem:[#allocation6 + $0x60] sm:$0xff]
    %v966 = vld [vmem:[#allocation6 + $0x68] sm:$0xff]
    %v967 = vld [vmem:[#allocation6 + $0x70] sm:$0xff]
    %v968 = vld [vmem:[#allocation6 + $0x78] sm:$0xff]
    %v969 = vld [vmem:[#allocation6 + $0x80] sm:$0xff]
    %v970 = vld [vmem:[#allocation6 + $0x88] sm:$0xff]
    %v971 = vld [vmem:[#allocation6 + $0x90] sm:$0xff]
    %v972 = vld [vmem:[#allocation6 + $0x98] sm:$0xff]
    %v973 = vld [vmem:[#allocation6 + $0xa0] sm:$0xff]
    %v974 = vld [vmem:[#allocation6 + $0xa8] sm:$0xff]
    %v975 = vld [vmem:[#allocation6 + $0xb0] sm:$0xff]
    %v976 = vld [vmem:[#allocation6 + $0xb8] sm:$0xff]
    %v977 = vld [vmem:[#allocation6 + $0xc0] sm:$0xff]
    %v978 = vld [vmem:[#allocation6 + $0xc8] sm:$0xff]
    %v979 = vld [vmem:[#allocation6 + $0xd0] sm:$0xff]
    %v980 = vld [vmem:[#allocation6 + $0xd8] sm:$0xff]
    %v981 = vld [vmem:[#allocation6 + $0xe0] sm:$0xff]
    %v982 = vld [vmem:[#allocation6 + $0xe8] sm:$0xff]
    %v983 = vld [vmem:[#allocation6 + $0xf0] sm:$0xff]
    %v984 = vld [vmem:[#allocation6 + $0xf8] sm:$0xff]
    %v985 = vld [vmem:[#allocation6 + $0x100] sm:$0xff]
    %v986 = vld [vmem:[#allocation6 + $0x108] sm:$0xff]
    %v987 = vld [vmem:[#allocation6 + $0x110] sm:$0xff]
    %v988 = vld [vmem:[#allocation6 + $0x118] sm:$0xff]
    %v989 = vld [vmem:[#allocation6 + $0x120] sm:$0xff]
    %v990 = vld [vmem:[#allocation6 + $0x128] sm:$0xff]
    %v991 = vld [vmem:[#allocation6 + $0x130] sm:$0xff]
    %v992 = vld [vmem:[#allocation6 + $0x138] sm:$0xff]
    %v993 = vld [vmem:[#allocation6 + $0x140] sm:$0xff]
    %v994 = vld [vmem:[#allocation6 + $0x148] sm:$0xff]
    %v995 = vld [vmem:[#allocation6 + $0x150] sm:$0xff]
    %v996 = vld [vmem:[#allocation6 + $0x158] sm:$0xff]
    %v997 = vld [vmem:[#allocation6 + $0x160] sm:$0xff]
    %v998 = vld [vmem:[#allocation6 + $0x168] sm:$0xff]
    %v999 = vld [vmem:[#allocation6 + $0x170] sm:$0xff]
    %v1000 = vld [vmem:[#allocation6 + $0x178] sm:$0xff]
    %v1001 = vld [vmem:[#allocation6 + $0x180] sm:$0xff]
    %v1002 = vld [vmem:[#allocation6 + $0x188] sm:$0xff]
    %v1003 = vld [vmem:[#allocation6 + $0x190] sm:$0xff]
    %v1004 = vld [vmem:[#allocation6 + $0x198] sm:$0xff]
    %v1005 = vld [vmem:[#allocation6 + $0x1a0] sm:$0xff]
    %v1006 = vld [vmem:[#allocation6 + $0x1a8] sm:$0xff]
    %v1007 = vld [vmem:[#allocation6 + $0x1b0] sm:$0xff]
    %v1008 = vld [vmem:[#allocation6 + $0x1b8] sm:$0xff]
    %v1009 = vld [vmem:[#allocation6 + $0x1c0] sm:$0xff]
    %v1010 = vld [vmem:[#allocation6 + $0x1c8] sm:$0xff]
    %v1011 = vld [vmem:[#allocation6 + $0x1d0] sm:$0xff]
    %v1012 = vld [vmem:[#allocation6 + $0x1d8] sm:$0xff]
    %v1013 = vld [vmem:[#allocation6 + $0x1e0] sm:$0xff]
    %v1014 = vld [vmem:[#allocation6 + $0x1e8] sm:$0xff]
    %v1015 = vld [vmem:[#allocation6 + $0x1f0] sm:$0xff]
    %v1016 = vld [vmem:[#allocation6 + $0x1f8] sm:$0xff]
    %v1017 = vld [vmem:[#allocation6 + $0x200] sm:$0xff]
    %v1018 = vld [vmem:[#allocation6 + $0x208] sm:$0xff]
    %v1019 = vld [vmem:[#allocation6 + $0x210] sm:$0xff]
    %v1020 = vld [vmem:[#allocation6 + $0x218] sm:$0xff]
    %v1021 = vld [vmem:[#allocation6 + $0x220] sm:$0xff]
    %v1022 = vld [vmem:[#allocation6 + $0x228] sm:$0xff]
    %v1023 = vld [vmem:[#allocation6 + $0x230] sm:$0xff]
    %v1024 = vld [vmem:[#allocation6 + $0x238] sm:$0xff]
    %v1025 = vld [vmem:[#allocation6 + $0x240] sm:$0xff]
    %v1026 = vld [vmem:[#allocation6 + $0x248] sm:$0xff]
    %v1027 = vld [vmem:[#allocation6 + $0x250] sm:$0xff]
    %v1028 = vld [vmem:[#allocation6 + $0x258] sm:$0xff]
    %v1029 = vld [vmem:[#allocation6 + $0x260] sm:$0xff]
    %v1030 = vld [vmem:[#allocation6 + $0x268] sm:$0xff]
    %v1031 = vld [vmem:[#allocation6 + $0x270] sm:$0xff]
    %v1032 = vld [vmem:[#allocation6 + $0x278] sm:$0xff]
    %v1033 = vld [vmem:[#allocation6 + $0x280] sm:$0xff]
    %v1034 = vld [vmem:[#allocation6 + $0x288] sm:$0xff]
    %v1035 = vld [vmem:[#allocation6 + $0x290] sm:$0xff]
    %v1036 = vld [vmem:[#allocation6 + $0x298] sm:$0xff]
    %v1037 = vld [vmem:[#allocation6 + $0x2a0] sm:$0xff]
    %v1038 = vld [vmem:[#allocation6 + $0x2a8] sm:$0xff]
    %v1039 = vld [vmem:[#allocation6 + $0x2b0] sm:$0xff]
    %v1040 = vld [vmem:[#allocation6 + $0x2b8] sm:$0xff]
    %v1041 = vld [vmem:[#allocation6 + $0x2c0] sm:$0xff]
    %v1042 = vld [vmem:[#allocation6 + $0x2c8] sm:$0xff]
    %v1043 = vld [vmem:[#allocation6 + $0x2d0] sm:$0xff]
    %v1044 = vld [vmem:[#allocation6 + $0x2d8] sm:$0xff]
    %v1045 = vld [vmem:[#allocation6 + $0x2e0] sm:$0xff]
    %v1046 = vld [vmem:[#allocation6 + $0x2e8] sm:$0xff]
    %v1047 = vld [vmem:[#allocation6 + $0x2f0] sm:$0xff]
    %v1048 = vld [vmem:[#allocation6 + $0x2f8] sm:$0xff]
    %v1049 = vld [vmem:[#allocation6 + $0x300] sm:$0xff]
    %v1050 = vld [vmem:[#allocation6 + $0x308] sm:$0xff]
    %v1051 = vld [vmem:[#allocation6 + $0x310] sm:$0xff]
    %v1052 = vld [vmem:[#allocation6 + $0x318] sm:$0xff]
    %v1053 = vld [vmem:[#allocation6 + $0x320] sm:$0xff]
    %v1054 = vld [vmem:[#allocation6 + $0x328] sm:$0xff]
    %v1055 = vld [vmem:[#allocation6 + $0x330] sm:$0xff]
    %v1056 = vld [vmem:[#allocation6 + $0x338] sm:$0xff]
    %v1057 = vld [vmem:[#allocation6 + $0x340] sm:$0xff]
    %v1058 = vld [vmem:[#allocation6 + $0x348] sm:$0xff]
    %v1059 = vld [vmem:[#allocation6 + $0x350] sm:$0xff]
    %v1060 = vld [vmem:[#allocation6 + $0x358] sm:$0xff]
    %v1061 = vld [vmem:[#allocation6 + $0x360] sm:$0xff]
    %v1062 = vld [vmem:[#allocation6 + $0x368] sm:$0xff]
    %v1063 = vld [vmem:[#allocation6 + $0x370] sm:$0xff]
    %v1064 = vld [vmem:[#allocation6 + $0x378] sm:$0xff]
    %v1065 = vld [vmem:[#allocation6 + $0x380] sm:$0xff]
    %v1066 = vld [vmem:[#allocation6 + $0x388] sm:$0xff]
    %v1067 = vld [vmem:[#allocation6 + $0x390] sm:$0xff]
    %v1068 = vld [vmem:[#allocation6 + $0x398] sm:$0xff]
    %v1069 = vld [vmem:[#allocation6 + $0x3a0] sm:$0xff]
    %v1070 = vld [vmem:[#allocation6 + $0x3a8] sm:$0xff]
    %v1071 = vld [vmem:[#allocation6 + $0x3b0] sm:$0xff]
    %v1072 = vld [vmem:[#allocation6 + $0x3b8] sm:$0xff]
    %v1073 = vld [vmem:[#allocation6 + $0x3c0] sm:$0xff]
    %v1074 = vld [vmem:[#allocation6 + $0x3c8] sm:$0xff]
    %v1075 = vld [vmem:[#allocation6 + $0x3d0] sm:$0xff]
    %v1076 = vld [vmem:[#allocation6 + $0x3d8] sm:$0xff]
    %v1077 = vld [vmem:[#allocation6 + $0x3e0] sm:$0xff]
    %v1078 = vld [vmem:[#allocation6 + $0x3e8] sm:$0xff]
    %v1079 = vld [vmem:[#allocation6 + $0x3f0] sm:$0xff]
    %v1080 = vld [vmem:[#allocation6 + $0x3f8] sm:$0xff]
    %v1081 = vld [vmem:[#allocation6 + $0x400] sm:$0xff]
    %v1082 = vld [vmem:[#allocation6 + $0x408] sm:$0xff]
    %v1083 = vld [vmem:[#allocation6 + $0x410] sm:$0xff]
    %v1084 = vld [vmem:[#allocation6 + $0x418] sm:$0xff]
    %v1085 = vld [vmem:[#allocation6 + $0x420] sm:$0xff]
    %v1086 = vld [vmem:[#allocation6 + $0x428] sm:$0xff]
    %v1087 = vld [vmem:[#allocation6 + $0x430] sm:$0xff]
    %v1088 = vld [vmem:[#allocation6 + $0x438] sm:$0xff]
    %v1089 = vld [vmem:[#allocation6 + $0x440] sm:$0xff]
    %v1090 = vld [vmem:[#allocation6 + $0x448] sm:$0xff]
    %v1091 = vld [vmem:[#allocation6 + $0x450] sm:$0xff]
    %v1092 = vld [vmem:[#allocation6 + $0x458] sm:$0xff]
    %v1093 = vld [vmem:[#allocation6 + $0x460] sm:$0xff]
    %v1094 = vld [vmem:[#allocation6 + $0x468] sm:$0xff]
    %v1095 = vld [vmem:[#allocation6 + $0x470] sm:$0xff]
    %v1096 = vld [vmem:[#allocation6 + $0x478] sm:$0xff]
    %v1097 = vld [vmem:[#allocation6 + $0x480] sm:$0xff]
    %v1098 = vld [vmem:[#allocation6 + $0x488] sm:$0xff]
    %v1099 = vld [vmem:[#allocation6 + $0x490] sm:$0xff]
    %v1100 = vld [vmem:[#allocation6 + $0x498] sm:$0xff]
    %v1101 = vld [vmem:[#allocation6 + $0x4a0] sm:$0xff]
    %v1102 = vld [vmem:[#allocation6 + $0x4a8] sm:$0xff]
    %v1103 = vld [vmem:[#allocation6 + $0x4b0] sm:$0xff]
    %v1104 = vld [vmem:[#allocation6 + $0x4b8] sm:$0xff]
    %v1105 = vld [vmem:[#allocation6 + $0x4c0] sm:$0xff]
    %v1106 = vld [vmem:[#allocation6 + $0x4c8] sm:$0xff]
    %v1107 = vld [vmem:[#allocation6 + $0x4d0] sm:$0xff]
    %v1108 = vld [vmem:[#allocation6 + $0x4d8] sm:$0xff]
    %v1109 = vld [vmem:[#allocation6 + $0x4e0] sm:$0xff]
    %v1110 = vld [vmem:[#allocation6 + $0x4e8] sm:$0xff]
    %v1111 = vld [vmem:[#allocation6 + $0x4f0] sm:$0xff]
    %v1112 = vld [vmem:[#allocation6 + $0x4f8] sm:$0xff]
    %v1113 = vld [vmem:[#allocation6 + $0x500] sm:$0xff]
    %v1114 = vld [vmem:[#allocation6 + $0x508] sm:$0xff]
    %v1115 = vld [vmem:[#allocation6 + $0x510] sm:$0xff]
    %v1116 = vld [vmem:[#allocation6 + $0x518] sm:$0xff]
    %v1117 = vld [vmem:[#allocation6 + $0x520] sm:$0xff]
    %v1118 = vld [vmem:[#allocation6 + $0x528] sm:$0xff]
    %v1119 = vld [vmem:[#allocation6 + $0x530] sm:$0xff]
    %v1120 = vld [vmem:[#allocation6 + $0x538] sm:$0xff]
    %v1121 = vld [vmem:[#allocation6 + $0x540] sm:$0xff]
    %v1122 = vld [vmem:[#allocation6 + $0x548] sm:$0xff]
    %v1123 = vld [vmem:[#allocation6 + $0x550] sm:$0xff]
    %v1124 = vld [vmem:[#allocation6 + $0x558] sm:$0xff]
    %v1125 = vld [vmem:[#allocation6 + $0x560] sm:$0xff]
    %v1126 = vld [vmem:[#allocation6 + $0x568] sm:$0xff]
    %v1127 = vld [vmem:[#allocation6 + $0x570] sm:$0xff]
    %v1128 = vld [vmem:[#allocation6 + $0x578] sm:$0xff]
    %v1129 = vld [vmem:[#allocation6 + $0x580] sm:$0xff]
    %v1130 = vld [vmem:[#allocation6 + $0x588] sm:$0xff]
    %v1131 = vld [vmem:[#allocation6 + $0x590] sm:$0xff]
    %v1132 = vld [vmem:[#allocation6 + $0x598] sm:$0xff]
    %v1133 = vld [vmem:[#allocation6 + $0x5a0] sm:$0xff]
    %v1134 = vld [vmem:[#allocation6 + $0x5a8] sm:$0xff]
    %v1135 = vld [vmem:[#allocation6 + $0x5b0] sm:$0xff]
    %v1136 = vld [vmem:[#allocation6 + $0x5b8] sm:$0xff]
    %v1137 = vld [vmem:[#allocation6 + $0x5c0] sm:$0xff]
    %v1138 = vld [vmem:[#allocation6 + $0x5c8] sm:$0xff]
    %v1139 = vld [vmem:[#allocation6 + $0x5d0] sm:$0xff]
    %v1140 = vld [vmem:[#allocation6 + $0x5d8] sm:$0xff]
    %v1141 = vld [vmem:[#allocation6 + $0x5e0] sm:$0xff]
    %v1142 = vld [vmem:[#allocation6 + $0x5e8] sm:$0xff]
    %v1143 = vld [vmem:[#allocation6 + $0x5f0] sm:$0xff]
    %v1144 = vld [vmem:[#allocation6 + $0x5f8] sm:$0xff]
    %v1145 = vld [vmem:[#allocation6 + $0x600] sm:$0xff]
    %v1146 = vld [vmem:[#allocation6 + $0x608] sm:$0xff]
    %v1147 = vld [vmem:[#allocation6 + $0x610] sm:$0xff]
    %v1148 = vld [vmem:[#allocation6 + $0x618] sm:$0xff]
    %v1149 = vld [vmem:[#allocation6 + $0x620] sm:$0xff]
    %v1150 = vld [vmem:[#allocation6 + $0x628] sm:$0xff]
    %v1151 = vld [vmem:[#allocation6 + $0x630] sm:$0xff]
    %v1152 = vld [vmem:[#allocation6 + $0x638] sm:$0xff]
    %v1153 = vld [vmem:[#allocation6 + $0x640] sm:$0xff]
    %v1154 = vld [vmem:[#allocation6 + $0x648] sm:$0xff]
    %v1155 = vld [vmem:[#allocation6 + $0x650] sm:$0xff]
    %v1156 = vld [vmem:[#allocation6 + $0x658] sm:$0xff]
    %v1157 = vld [vmem:[#allocation6 + $0x660] sm:$0xff]
    %v1158 = vld [vmem:[#allocation6 + $0x668] sm:$0xff]
    %v1159 = vld [vmem:[#allocation6 + $0x670] sm:$0xff]
    %v1160 = vld [vmem:[#allocation6 + $0x678] sm:$0xff]
    %v1161 = vld [vmem:[#allocation6 + $0x680] sm:$0xff]
    %v1162 = vld [vmem:[#allocation6 + $0x688] sm:$0xff]
    %v1163 = vld [vmem:[#allocation6 + $0x690] sm:$0xff]
    %v1164 = vld [vmem:[#allocation6 + $0x698] sm:$0xff]
    %v1165 = vld [vmem:[#allocation6 + $0x6a0] sm:$0xff]
    %v1166 = vld [vmem:[#allocation6 + $0x6a8] sm:$0xff]
    %v1167 = vld [vmem:[#allocation6 + $0x6b0] sm:$0xff]
    %v1168 = vld [vmem:[#allocation6 + $0x6b8] sm:$0xff]
    %v1169 = vld [vmem:[#allocation6 + $0x6c0] sm:$0xff]
    %v1170 = vld [vmem:[#allocation6 + $0x6c8] sm:$0xff]
    %v1171 = vld [vmem:[#allocation6 + $0x6d0] sm:$0xff]
    %v1172 = vld [vmem:[#allocation6 + $0x6d8] sm:$0xff]
    %v1173 = vld [vmem:[#allocation6 + $0x6e0] sm:$0xff]
    %v1174 = vld [vmem:[#allocation6 + $0x6e8] sm:$0xff]
    %v1175 = vld [vmem:[#allocation6 + $0x6f0] sm:$0xff]
    %v1176 = vld [vmem:[#allocation6 + $0x6f8] sm:$0xff]
    %v1177 = vld [vmem:[#allocation6 + $0x700] sm:$0xff]
    %v1178 = vld [vmem:[#allocation6 + $0x708] sm:$0xff]
    %v1179 = vld [vmem:[#allocation6 + $0x710] sm:$0xff]
    %v1180 = vld [vmem:[#allocation6 + $0x718] sm:$0xff]
    %v1181 = vld [vmem:[#allocation6 + $0x720] sm:$0xff]
    %v1182 = vld [vmem:[#allocation6 + $0x728] sm:$0xff]
    %v1183 = vld [vmem:[#allocation6 + $0x730] sm:$0xff]
    %v1184 = vld [vmem:[#allocation6 + $0x738] sm:$0xff]
    %v1185 = vld [vmem:[#allocation6 + $0x740] sm:$0xff]
    %v1186 = vld [vmem:[#allocation6 + $0x748] sm:$0xff]
    %v1187 = vld [vmem:[#allocation6 + $0x750] sm:$0xff]
    %v1188 = vld [vmem:[#allocation6 + $0x758] sm:$0xff]
    %v1189 = vld [vmem:[#allocation6 + $0x760] sm:$0xff]
    %v1190 = vld [vmem:[#allocation6 + $0x768] sm:$0xff]
    %v1191 = vld [vmem:[#allocation6 + $0x770] sm:$0xff]
    %v1192 = vld [vmem:[#allocation6 + $0x778] sm:$0xff]
    %v1193 = vld [vmem:[#allocation6 + $0x780] sm:$0xff]
    %v1194 = vld [vmem:[#allocation6 + $0x788] sm:$0xff]
    %v1195 = vld [vmem:[#allocation6 + $0x790] sm:$0xff]
    %v1196 = vld [vmem:[#allocation6 + $0x798] sm:$0xff]
    %v1197 = vld [vmem:[#allocation6 + $0x7a0] sm:$0xff]
    %v1198 = vld [vmem:[#allocation6 + $0x7a8] sm:$0xff]
    %v1199 = vld [vmem:[#allocation6 + $0x7b0] sm:$0xff]
    %v1200 = vld [vmem:[#allocation6 + $0x7b8] sm:$0xff]
    %v1201 = vld [vmem:[#allocation6 + $0x7c0] sm:$0xff]
    %v1202 = vld [vmem:[#allocation6 + $0x7c8] sm:$0xff]
    %v1203 = vld [vmem:[#allocation6 + $0x7d0] sm:$0xff]
    %v1204 = vld [vmem:[#allocation6 + $0x7d8] sm:$0xff]
    %v1205 = vld [vmem:[#allocation6 + $0x7e0] sm:$0xff]
    %v1206 = vld [vmem:[#allocation6 + $0x7e8] sm:$0xff]
    %v1207 = vld [vmem:[#allocation6 + $0x7f0] sm:$0xff]
    %v1208 = vld [vmem:[#allocation6 + $0x7f8] sm:$0xff]
    %v1209 = vld [vmem:[#allocation6 + $0x800] sm:$0xff]
    %v1210 = vld [vmem:[#allocation6 + $0x808] sm:$0xff]
    %v1211 = vld [vmem:[#allocation6 + $0x810] sm:$0xff]
    %v1212 = vld [vmem:[#allocation6 + $0x818] sm:$0xff]
    %v1213 = vld [vmem:[#allocation6 + $0x820] sm:$0xff]
    %v1214 = vld [vmem:[#allocation6 + $0x828] sm:$0xff]
    %v1215 = vld [vmem:[#allocation6 + $0x830] sm:$0xff]
    %v1216 = vld [vmem:[#allocation6 + $0x838] sm:$0xff]
    %v1217 = vld [vmem:[#allocation6 + $0x840] sm:$0xff]
    %v1218 = vld [vmem:[#allocation6 + $0x848] sm:$0xff]
    %v1219 = vld [vmem:[#allocation6 + $0x850] sm:$0xff]
    %v1220 = vld [vmem:[#allocation6 + $0x858] sm:$0xff]
    %v1221 = vld [vmem:[#allocation6 + $0x860] sm:$0xff]
    %v1222 = vld [vmem:[#allocation6 + $0x868] sm:$0xff]
    %v1223 = vld [vmem:[#allocation6 + $0x870] sm:$0xff]
    %v1224 = vld [vmem:[#allocation6 + $0x878] sm:$0xff]
    %v1225 = vld [vmem:[#allocation6 + $0x880] sm:$0xff]
    %v1226 = vld [vmem:[#allocation6 + $0x888] sm:$0xff]
    %v1227 = vld [vmem:[#allocation6 + $0x890] sm:$0xff]
    %v1228 = vld [vmem:[#allocation6 + $0x898] sm:$0xff]
    %v1229 = vld [vmem:[#allocation6 + $0x8a0] sm:$0xff]
    %v1230 = vld [vmem:[#allocation6 + $0x8a8] sm:$0xff]
    %v1231 = vld [vmem:[#allocation6 + $0x8b0] sm:$0xff]
    %v1232 = vld [vmem:[#allocation6 + $0x8b8] sm:$0xff]
    %v1233 = vld [vmem:[#allocation6 + $0x8c0] sm:$0xff]
    %v1234 = vld [vmem:[#allocation6 + $0x8c8] sm:$0xff]
    %v1235 = vld [vmem:[#allocation6 + $0x8d0] sm:$0xff]
    %v1236 = vld [vmem:[#allocation6 + $0x8d8] sm:$0xff]
    %v1237 = vld [vmem:[#allocation6 + $0x8e0] sm:$0xff]
    %v1238 = vld [vmem:[#allocation6 + $0x8e8] sm:$0xff]
    %v1239 = vld [vmem:[#allocation6 + $0x8f0] sm:$0xff]
    %v1240 = vld [vmem:[#allocation6 + $0x8f8] sm:$0xff]
    %v1241 = vld [vmem:[#allocation6 + $0x900] sm:$0xff]
    %v1242 = vld [vmem:[#allocation6 + $0x908] sm:$0xff]
    %v1243 = vld [vmem:[#allocation6 + $0x910] sm:$0xff]
    %v1244 = vld [vmem:[#allocation6 + $0x918] sm:$0xff]
    %v1245 = vld [vmem:[#allocation6 + $0x920] sm:$0xff]
    %v1246 = vld [vmem:[#allocation6 + $0x928] sm:$0xff]
    %v1247 = vld [vmem:[#allocation6 + $0x930] sm:$0xff]
    %v1248 = vld [vmem:[#allocation6 + $0x938] sm:$0xff]
    %v1249 = vld [vmem:[#allocation6 + $0x940] sm:$0xff]
    %v1250 = vld [vmem:[#allocation6 + $0x948] sm:$0xff]
    %v1251 = vld [vmem:[#allocation6 + $0x950] sm:$0xff]
    %v1252 = vld [vmem:[#allocation6 + $0x958] sm:$0xff]
    %v1253 = vld [vmem:[#allocation6 + $0x960] sm:$0xff]
    %v1254 = vld [vmem:[#allocation6 + $0x968] sm:$0xff]
    %v1255 = vld [vmem:[#allocation6 + $0x970] sm:$0xff]
    %v1256 = vld [vmem:[#allocation6 + $0x978] sm:$0xff]
    %v1257 = vld [vmem:[#allocation6 + $0x980] sm:$0xff]
    %v1258 = vld [vmem:[#allocation6 + $0x988] sm:$0xff]
    %v1259 = vld [vmem:[#allocation6 + $0x990] sm:$0xff]
    %v1260 = vld [vmem:[#allocation6 + $0x998] sm:$0xff]
    %v1261 = vld [vmem:[#allocation6 + $0x9a0] sm:$0xff]
    %v1262 = vld [vmem:[#allocation6 + $0x9a8] sm:$0xff]
    %v1263 = vld [vmem:[#allocation6 + $0x9b0] sm:$0xff]
    %v1264 = vld [vmem:[#allocation6 + $0x9b8] sm:$0xff]
    %v1265 = vld [vmem:[#allocation6 + $0x9c0] sm:$0xff]
    %v1266 = vld [vmem:[#allocation6 + $0x9c8] sm:$0xff]
    %v1267 = vld [vmem:[#allocation6 + $0x9d0] sm:$0xff]
    %v1268 = vld [vmem:[#allocation6 + $0x9d8] sm:$0xff]
    %v1269 = vld [vmem:[#allocation6 + $0x9e0] sm:$0xff]
    %v1270 = vld [vmem:[#allocation6 + $0x9e8] sm:$0xff]
    %v1271 = vld [vmem:[#allocation6 + $0x9f0] sm:$0xff]
    %v1272 = vld [vmem:[#allocation6 + $0x9f8] sm:$0xff]
    %v1273 = vld [vmem:[#allocation6 + $0xa00] sm:$0xff]
    %v1274 = vld [vmem:[#allocation6 + $0xa08] sm:$0xff]
    %v1275 = vld [vmem:[#allocation6 + $0xa10] sm:$0xff]
    %v1276 = vld [vmem:[#allocation6 + $0xa18] sm:$0xff]
    %v1277 = vld [vmem:[#allocation6 + $0xa20] sm:$0xff]
    %v1278 = vld [vmem:[#allocation6 + $0xa28] sm:$0xff]
    %v1279 = vld [vmem:[#allocation6 + $0xa30] sm:$0xff]
    %v1280 = vld [vmem:[#allocation6 + $0xa38] sm:$0xff]
    %v1281 = vld [vmem:[#allocation6 + $0xa40] sm:$0xff]
    %v1282 = vld [vmem:[#allocation6 + $0xa48] sm:$0xff]
    %v1283 = vld [vmem:[#allocation6 + $0xa50] sm:$0xff]
    %v1284 = vld [vmem:[#allocation6 + $0xa58] sm:$0xff]
    %v1285 = vld [vmem:[#allocation6 + $0xa60] sm:$0xff]
    %v1286 = vld [vmem:[#allocation6 + $0xa68] sm:$0xff]
    %v1287 = vld [vmem:[#allocation6 + $0xa70] sm:$0xff]
    %v1288 = vld [vmem:[#allocation6 + $0xa78] sm:$0xff]
    %v1289 = vld [vmem:[#allocation6 + $0xa80] sm:$0xff]
    %v1290 = vld [vmem:[#allocation6 + $0xa88] sm:$0xff]
    %v1291 = vld [vmem:[#allocation6 + $0xa90] sm:$0xff]
    %v1292 = vld [vmem:[#allocation6 + $0xa98] sm:$0xff]
    %v1293 = vld [vmem:[#allocation6 + $0xaa0] sm:$0xff]
    %v1294 = vld [vmem:[#allocation6 + $0xaa8] sm:$0xff]
    %v1295 = vld [vmem:[#allocation6 + $0xab0] sm:$0xff]
    %v1296 = vld [vmem:[#allocation6 + $0xab8] sm:$0xff]
    %v1297 = vld [vmem:[#allocation6 + $0xac0] sm:$0xff]
    %v1298 = vld [vmem:[#allocation6 + $0xac8] sm:$0xff]
    %v1299 = vld [vmem:[#allocation6 + $0xad0] sm:$0xff]
    %v1300 = vld [vmem:[#allocation6 + $0xad8] sm:$0xff]
    %v1301 = vld [vmem:[#allocation6 + $0xae0] sm:$0xff]
    %v1302 = vld [vmem:[#allocation6 + $0xae8] sm:$0xff]
    %v1303 = vld [vmem:[#allocation6 + $0xaf0] sm:$0xff]
    %v1304 = vld [vmem:[#allocation6 + $0xaf8] sm:$0xff]
    %v1305 = vld [vmem:[#allocation6 + $0xb00] sm:$0xff]
    %v1306 = vld [vmem:[#allocation6 + $0xb08] sm:$0xff]
    %v1307 = vld [vmem:[#allocation6 + $0xb10] sm:$0xff]
    %v1308 = vld [vmem:[#allocation6 + $0xb18] sm:$0xff]
    %v1309 = vld [vmem:[#allocation6 + $0xb20] sm:$0xff]
    %v1310 = vld [vmem:[#allocation6 + $0xb28] sm:$0xff]
    %v1311 = vld [vmem:[#allocation6 + $0xb30] sm:$0xff]
    %v1312 = vld [vmem:[#allocation6 + $0xb38] sm:$0xff]
    %v1313 = vld [vmem:[#allocation6 + $0xb40] sm:$0xff]
    %v1314 = vld [vmem:[#allocation6 + $0xb48] sm:$0xff]
    %v1315 = vld [vmem:[#allocation6 + $0xb50] sm:$0xff]
    %v1316 = vld [vmem:[#allocation6 + $0xb58] sm:$0xff]
    %v1317 = vld [vmem:[#allocation6 + $0xb60] sm:$0xff]
    %v1318 = vld [vmem:[#allocation6 + $0xb68] sm:$0xff]
    %v1319 = vld [vmem:[#allocation6 + $0xb70] sm:$0xff]
    %v1320 = vld [vmem:[#allocation6 + $0xb78] sm:$0xff]
    %v1321 = vld [vmem:[#allocation6 + $0xb80] sm:$0xff]
    %v1322 = vld [vmem:[#allocation6 + $0xb88] sm:$0xff]
    %v1323 = vld [vmem:[#allocation6 + $0xb90] sm:$0xff]
    %v1324 = vld [vmem:[#allocation6 + $0xb98] sm:$0xff]
    %v1325 = vld [vmem:[#allocation6 + $0xba0] sm:$0xff]
    %v1326 = vld [vmem:[#allocation6 + $0xba8] sm:$0xff]
    %v1327 = vld [vmem:[#allocation6 + $0xbb0] sm:$0xff]
    %v1328 = vld [vmem:[#allocation6 + $0xbb8] sm:$0xff]
    %v1329 = vld [vmem:[#allocation6 + $0xbc0] sm:$0xff]
    %v1330 = vld [vmem:[#allocation6 + $0xbc8] sm:$0xff]
    %v1331 = vld [vmem:[#allocation6 + $0xbd0] sm:$0xff]
    %v1332 = vld [vmem:[#allocation6 + $0xbd8] sm:$0xff]
    %v1333 = vld [vmem:[#allocation6 + $0xbe0] sm:$0xff]
    %v1334 = vld [vmem:[#allocation6 + $0xbe8] sm:$0xff]
    %v1335 = vld [vmem:[#allocation6 + $0xbf0] sm:$0xff]
    %v1336 = vld [vmem:[#allocation6 + $0xbf8] sm:$0xff]
    %v1337 = vld [vmem:[#allocation6 + $0xc00] sm:$0xff]
    %v1338 = vld [vmem:[#allocation6 + $0xc08] sm:$0xff]
    %v1339 = vld [vmem:[#allocation6 + $0xc10] sm:$0xff]
    %v1340 = vld [vmem:[#allocation6 + $0xc18] sm:$0xff]
    %v1341 = vld [vmem:[#allocation6 + $0xc20] sm:$0xff]
    %v1342 = vld [vmem:[#allocation6 + $0xc28] sm:$0xff]
    %v1343 = vld [vmem:[#allocation6 + $0xc30] sm:$0xff]
    %v1344 = vld [vmem:[#allocation6 + $0xc38] sm:$0xff]
    %v1345 = vld [vmem:[#allocation6 + $0xc40] sm:$0xff]
    %v1346 = vld [vmem:[#allocation6 + $0xc48] sm:$0xff]
    %v1347 = vld [vmem:[#allocation6 + $0xc50] sm:$0xff]
    %v1348 = vld [vmem:[#allocation6 + $0xc58] sm:$0xff]
    %v1349 = vld [vmem:[#allocation6 + $0xc60] sm:$0xff]
    %v1350 = vld [vmem:[#allocation6 + $0xc68] sm:$0xff]
    %v1351 = vld [vmem:[#allocation6 + $0xc70] sm:$0xff]
    %v1352 = vld [vmem:[#allocation6 + $0xc78] sm:$0xff]
    %v1353 = vld [vmem:[#allocation6 + $0xc80] sm:$0xff]
    %v1354 = vld [vmem:[#allocation6 + $0xc88] sm:$0xff]
    %v1355 = vld [vmem:[#allocation6 + $0xc90] sm:$0xff]
    %v1356 = vld [vmem:[#allocation6 + $0xc98] sm:$0xff]
    %v1357 = vld [vmem:[#allocation6 + $0xca0] sm:$0xff]
    %v1358 = vld [vmem:[#allocation6 + $0xca8] sm:$0xff]
    %v1359 = vld [vmem:[#allocation6 + $0xcb0] sm:$0xff]
    %v1360 = vld [vmem:[#allocation6 + $0xcb8] sm:$0xff]
    %v1361 = vld [vmem:[#allocation6 + $0xcc0] sm:$0xff]
    %v1362 = vld [vmem:[#allocation6 + $0xcc8] sm:$0xff]
    %v1363 = vld [vmem:[#allocation6 + $0xcd0] sm:$0xff]
    %v1364 = vld [vmem:[#allocation6 + $0xcd8] sm:$0xff]
    %v1365 = vld [vmem:[#allocation6 + $0xce0] sm:$0xff]
    %v1366 = vld [vmem:[#allocation6 + $0xce8] sm:$0xff]
    %v1367 = vld [vmem:[#allocation6 + $0xcf0] sm:$0xff]
    %v1368 = vld [vmem:[#allocation6 + $0xcf8] sm:$0xff]
    %v1369 = vld [vmem:[#allocation6 + $0xd00] sm:$0xff]
    %v1370 = vld [vmem:[#allocation6 + $0xd08] sm:$0xff]
    %v1371 = vld [vmem:[#allocation6 + $0xd10] sm:$0xff]
    %v1372 = vld [vmem:[#allocation6 + $0xd18] sm:$0xff]
    %v1373 = vld [vmem:[#allocation6 + $0xd20] sm:$0xff]
    %v1374 = vld [vmem:[#allocation6 + $0xd28] sm:$0xff]
    %v1375 = vld [vmem:[#allocation6 + $0xd30] sm:$0xff]
    %v1376 = vld [vmem:[#allocation6 + $0xd38] sm:$0xff]
    %v1377 = vld [vmem:[#allocation6 + $0xd40] sm:$0xff]
    %v1378 = vld [vmem:[#allocation6 + $0xd48] sm:$0xff]
    %v1379 = vld [vmem:[#allocation6 + $0xd50] sm:$0xff]
    %v1380 = vld [vmem:[#allocation6 + $0xd58] sm:$0xff]
    %v1381 = vld [vmem:[#allocation6 + $0xd60] sm:$0xff]
    %v1382 = vld [vmem:[#allocation6 + $0xd68] sm:$0xff]
    %v1383 = vld [vmem:[#allocation6 + $0xd70] sm:$0xff]
    %v1384 = vld [vmem:[#allocation6 + $0xd78] sm:$0xff]
    %v1385 = vld [vmem:[#allocation6 + $0xd80] sm:$0xff]
    %v1386 = vld [vmem:[#allocation6 + $0xd88] sm:$0xff]
    %v1387 = vld [vmem:[#allocation6 + $0xd90] sm:$0xff]
    %v1388 = vld [vmem:[#allocation6 + $0xd98] sm:$0xff]
    %v1389 = vld [vmem:[#allocation6 + $0xda0] sm:$0xff]
    %v1390 = vld [vmem:[#allocation6 + $0xda8] sm:$0xff]
    %v1391 = vld [vmem:[#allocation6 + $0xdb0] sm:$0xff]
    %v1392 = vld [vmem:[#allocation6 + $0xdb8] sm:$0xff]
    %v1393 = vld [vmem:[#allocation6 + $0xdc0] sm:$0xff]
    %v1394 = vld [vmem:[#allocation6 + $0xdc8] sm:$0xff]
    %v1395 = vld [vmem:[#allocation6 + $0xdd0] sm:$0xff]
    %v1396 = vld [vmem:[#allocation6 + $0xdd8] sm:$0xff]
    %v1397 = vld [vmem:[#allocation6 + $0xde0] sm:$0xff]
    %v1398 = vld [vmem:[#allocation6 + $0xde8] sm:$0xff]
    %v1399 = vld [vmem:[#allocation6 + $0xdf0] sm:$0xff]
    %v1400 = vld [vmem:[#allocation6 + $0xdf8] sm:$0xff]
    %v1401 = vld [vmem:[#allocation6 + $0xe00] sm:$0xff]
    %v1402 = vld [vmem:[#allocation6 + $0xe08] sm:$0xff]
    %v1403 = vld [vmem:[#allocation6 + $0xe10] sm:$0xff]
    %v1404 = vld [vmem:[#allocation6 + $0xe18] sm:$0xff]
    %v1405 = vld [vmem:[#allocation6 + $0xe20] sm:$0xff]
    %v1406 = vld [vmem:[#allocation6 + $0xe28] sm:$0xff]
    %v1407 = vld [vmem:[#allocation6 + $0xe30] sm:$0xff]
    %v1408 = vld [vmem:[#allocation6 + $0xe38] sm:$0xff]
    %v1409 = vld [vmem:[#allocation6 + $0xe40] sm:$0xff]
    %v1410 = vld [vmem:[#allocation6 + $0xe48] sm:$0xff]
    %v1411 = vld [vmem:[#allocation6 + $0xe50] sm:$0xff]
    %v1412 = vld [vmem:[#allocation6 + $0xe58] sm:$0xff]
    %v1413 = vld [vmem:[#allocation6 + $0xe60] sm:$0xff]
    %v1414 = vld [vmem:[#allocation6 + $0xe68] sm:$0xff]
    %v1415 = vld [vmem:[#allocation6 + $0xe70] sm:$0xff]
    %v1416 = vld [vmem:[#allocation6 + $0xe78] sm:$0xff]
    %v1417 = vld [vmem:[#allocation6 + $0xe80] sm:$0xff]
    %v1418 = vld [vmem:[#allocation6 + $0xe88] sm:$0xff]
    %v1419 = vld [vmem:[#allocation6 + $0xe90] sm:$0xff]
    %v1420 = vld [vmem:[#allocation6 + $0xe98] sm:$0xff]
    %v1421 = vld [vmem:[#allocation6 + $0xea0] sm:$0xff]
    %v1422 = vld [vmem:[#allocation6 + $0xea8] sm:$0xff]
    %v1423 = vld [vmem:[#allocation6 + $0xeb0] sm:$0xff]
    %v1424 = vld [vmem:[#allocation6 + $0xeb8] sm:$0xff]
    %v1425 = vld [vmem:[#allocation6 + $0xec0] sm:$0xff]
    %v1426 = vld [vmem:[#allocation6 + $0xec8] sm:$0xff]
    %v1427 = vld [vmem:[#allocation6 + $0xed0] sm:$0xff]
    %v1428 = vld [vmem:[#allocation6 + $0xed8] sm:$0xff]
    %v1429 = vld [vmem:[#allocation6 + $0xee0] sm:$0xff]
    %v1430 = vld [vmem:[#allocation6 + $0xee8] sm:$0xff]
    %v1431 = vld [vmem:[#allocation6 + $0xef0] sm:$0xff]
    %v1432 = vld [vmem:[#allocation6 + $0xef8] sm:$0xff]
    %v1433 = vld [vmem:[#allocation6 + $0xf00] sm:$0xff]
    %v1434 = vld [vmem:[#allocation6 + $0xf08] sm:$0xff]
    %v1435 = vld [vmem:[#allocation6 + $0xf10] sm:$0xff]
    %v1436 = vld [vmem:[#allocation6 + $0xf18] sm:$0xff]
    %v1437 = vld [vmem:[#allocation6 + $0xf20] sm:$0xff]
    %v1438 = vld [vmem:[#allocation6 + $0xf28] sm:$0xff]
    %v1439 = vld [vmem:[#allocation6 + $0xf30] sm:$0xff]
    %v1440 = vld [vmem:[#allocation6 + $0xf38] sm:$0xff]
    %v1441 = vld [vmem:[#allocation6 + $0xf40] sm:$0xff]
    %v1442 = vld [vmem:[#allocation6 + $0xf48] sm:$0xff]
    %v1443 = vld [vmem:[#allocation6 + $0xf50] sm:$0xff]
    %v1444 = vld [vmem:[#allocation6 + $0xf58] sm:$0xff]
    %v1445 = vld [vmem:[#allocation6 + $0xf60] sm:$0xff]
    %v1446 = vld [vmem:[#allocation6 + $0xf68] sm:$0xff]
    %v1447 = vld [vmem:[#allocation6 + $0xf70] sm:$0xff]
    %v1448 = vld [vmem:[#allocation6 + $0xf78] sm:$0xff]
    %v1449 = vld [vmem:[#allocation6 + $0xf80] sm:$0xff]
    %v1450 = vld [vmem:[#allocation6 + $0xf88] sm:$0xff]
    %v1451 = vld [vmem:[#allocation6 + $0xf90] sm:$0xff]
    %v1452 = vld [vmem:[#allocation6 + $0xf98] sm:$0xff]
    %v1453 = vld [vmem:[#allocation6 + $0xfa0] sm:$0xff]
    %v1454 = vld [vmem:[#allocation6 + $0xfa8] sm:$0xff]
    %v1455 = vld [vmem:[#allocation6 + $0xfb0] sm:$0xff]
    %v1456 = vld [vmem:[#allocation6 + $0xfb8] sm:$0xff]
    %v1457 = vld [vmem:[#allocation6 + $0xfc0] sm:$0xff]
    %v1458 = vld [vmem:[#allocation6 + $0xfc8] sm:$0xff]
    %v1459 = vld [vmem:[#allocation6 + $0xfd0] sm:$0xff]
    %v1460 = vld [vmem:[#allocation6 + $0xfd8] sm:$0xff]
    %v1461 = vld [vmem:[#allocation6 + $0xfe0] sm:$0xff]
    %v1462 = vld [vmem:[#allocation6 + $0xfe8] sm:$0xff]
    %v1463 = vld [vmem:[#allocation6 + $0xff0] sm:$0xff]
    %v1464 = vld [vmem:[#allocation6 + $0xff8] sm:$0xff]
    %v1465 = vld [vmem:[#allocation6 + $0x1000] sm:$0xff]
    %v1466 = vld [vmem:[#allocation6 + $0x1008] sm:$0xff]
    %v1467 = vld [vmem:[#allocation6 + $0x1010] sm:$0xff]
    %v1468 = vld [vmem:[#allocation6 + $0x1018] sm:$0xff]
    %v1469 = vld [vmem:[#allocation6 + $0x1020] sm:$0xff]
    %v1470 = vld [vmem:[#allocation6 + $0x1028] sm:$0xff]
    %v1471 = vld [vmem:[#allocation6 + $0x1030] sm:$0xff]
    %v1472 = vld [vmem:[#allocation6 + $0x1038] sm:$0xff]
    %v1473 = vld [vmem:[#allocation6 + $0x1040] sm:$0xff]
    %v1474 = vld [vmem:[#allocation6 + $0x1048] sm:$0xff]
    %v1475 = vld [vmem:[#allocation6 + $0x1050] sm:$0xff]
    %v1476 = vld [vmem:[#allocation6 + $0x1058] sm:$0xff]
    %v1477 = vld [vmem:[#allocation6 + $0x1060] sm:$0xff]
    %v1478 = vld [vmem:[#allocation6 + $0x1068] sm:$0xff]
    %v1479 = vld [vmem:[#allocation6 + $0x1070] sm:$0xff]
    %v1480 = vld [vmem:[#allocation6 + $0x1078] sm:$0xff]
    %v1481 = vld [vmem:[#allocation6 + $0x1080] sm:$0xff]
    %v1482 = vld [vmem:[#allocation6 + $0x1088] sm:$0xff]
    %v1483 = vld [vmem:[#allocation6 + $0x1090] sm:$0xff]
    %v1484 = vld [vmem:[#allocation6 + $0x1098] sm:$0xff]
    %v1485 = vld [vmem:[#allocation6 + $0x10a0] sm:$0xff]
    %v1486 = vld [vmem:[#allocation6 + $0x10a8] sm:$0xff]
    %v1487 = vld [vmem:[#allocation6 + $0x10b0] sm:$0xff]
    %v1488 = vld [vmem:[#allocation6 + $0x10b8] sm:$0xff]
    %v1489 = vld [vmem:[#allocation6 + $0x10c0] sm:$0xff]
    %v1490 = vld [vmem:[#allocation6 + $0x10c8] sm:$0xff]
    %v1491 = vld [vmem:[#allocation6 + $0x10d0] sm:$0xff]
    %v1492 = vld [vmem:[#allocation6 + $0x10d8] sm:$0xff]
    %v1493 = vld [vmem:[#allocation6 + $0x10e0] sm:$0xff]
    %v1494 = vld [vmem:[#allocation6 + $0x10e8] sm:$0xff]
    %v1495 = vld [vmem:[#allocation6 + $0x10f0] sm:$0xff]
    %v1496 = vld [vmem:[#allocation6 + $0x10f8] sm:$0xff]
    %v1497 = vld [vmem:[#allocation6 + $0x1100] sm:$0xff]
    %v1498 = vld [vmem:[#allocation6 + $0x1108] sm:$0xff]
    %v1499 = vld [vmem:[#allocation6 + $0x1110] sm:$0xff]
    %v1500 = vld [vmem:[#allocation6 + $0x1118] sm:$0xff]
    %v1501 = vld [vmem:[#allocation6 + $0x1120] sm:$0xff]
    %v1502 = vld [vmem:[#allocation6 + $0x1128] sm:$0xff]
    %v1503 = vld [vmem:[#allocation6 + $0x1130] sm:$0xff]
    %v1504 = vld [vmem:[#allocation6 + $0x1138] sm:$0xff]
    %v1505 = vld [vmem:[#allocation6 + $0x1140] sm:$0xff]
    %v1506 = vld [vmem:[#allocation6 + $0x1148] sm:$0xff]
    %v1507 = vld [vmem:[#allocation6 + $0x1150] sm:$0xff]
    %v1508 = vld [vmem:[#allocation6 + $0x1158] sm:$0xff]
    %v1509 = vld [vmem:[#allocation6 + $0x1160] sm:$0xff]
    %v1510 = vld [vmem:[#allocation6 + $0x1168] sm:$0xff]
    %v1511 = vld [vmem:[#allocation6 + $0x1170] sm:$0xff]
    %v1512 = vld [vmem:[#allocation6 + $0x1178] sm:$0xff]
    %v1513 = vld [vmem:[#allocation6 + $0x1180] sm:$0xff]
    %v1514 = vld [vmem:[#allocation6 + $0x1188] sm:$0xff]
    %v1515 = vld [vmem:[#allocation6 + $0x1190] sm:$0xff]
    %v1516 = vld [vmem:[#allocation6 + $0x1198] sm:$0xff]
    %v1517 = vld [vmem:[#allocation6 + $0x11a0] sm:$0xff]
    %v1518 = vld [vmem:[#allocation6 + $0x11a8] sm:$0xff]
    %v1519 = vld [vmem:[#allocation6 + $0x11b0] sm:$0xff]
    %v1520 = vld [vmem:[#allocation6 + $0x11b8] sm:$0xff]
    %v1521 = vld [vmem:[#allocation6 + $0x11c0] sm:$0xff]
    %v1522 = vld [vmem:[#allocation6 + $0x11c8] sm:$0xff]
    %v1523 = vld [vmem:[#allocation6 + $0x11d0] sm:$0xff]
    %v1524 = vld [vmem:[#allocation6 + $0x11d8] sm:$0xff]
    %v1525 = vld [vmem:[#allocation6 + $0x11e0] sm:$0xff]
    %v1526 = vld [vmem:[#allocation6 + $0x11e8] sm:$0xff]
    %v1527 = vld [vmem:[#allocation6 + $0x11f0] sm:$0xff]
    %v1528 = vld [vmem:[#allocation6 + $0x11f8] sm:$0xff]
    %v1529 = vld [vmem:[#allocation6 + $0x1200] sm:$0xff]
    %v1530 = vld [vmem:[#allocation6 + $0x1208] sm:$0xff]
    %v1531 = vld [vmem:[#allocation6 + $0x1210] sm:$0xff]
    %v1532 = vld [vmem:[#allocation6 + $0x1218] sm:$0xff]
    %v1533 = vld [vmem:[#allocation6 + $0x1220] sm:$0xff]
    %v1534 = vld [vmem:[#allocation6 + $0x1228] sm:$0xff]
    %v1535 = vld [vmem:[#allocation6 + $0x1230] sm:$0xff]
    %v1536 = vld [vmem:[#allocation6 + $0x1238] sm:$0xff]
    %v1537 = vld [vmem:[#allocation6 + $0x1240] sm:$0xff]
    %v1538 = vld [vmem:[#allocation6 + $0x1248] sm:$0xff]
    %v1539 = vld [vmem:[#allocation6 + $0x1250] sm:$0xff]
    %v1540 = vld [vmem:[#allocation6 + $0x1258] sm:$0xff]
    %v1541 = vld [vmem:[#allocation6 + $0x1260] sm:$0xff]
    %v1542 = vld [vmem:[#allocation6 + $0x1268] sm:$0xff]
    %v1543 = vld [vmem:[#allocation6 + $0x1270] sm:$0xff]
    %v1544 = vld [vmem:[#allocation6 + $0x1278] sm:$0xff]
    %v1545 = vld [vmem:[#allocation6 + $0x1280] sm:$0xff]
    %v1546 = vld [vmem:[#allocation6 + $0x1288] sm:$0xff]
    %v1547 = vld [vmem:[#allocation6 + $0x1290] sm:$0xff]
    %v1548 = vld [vmem:[#allocation6 + $0x1298] sm:$0xff]
    %v1549 = vld [vmem:[#allocation6 + $0x12a0] sm:$0xff]
    %v1550 = vld [vmem:[#allocation6 + $0x12a8] sm:$0xff]
    %v1551 = vld [vmem:[#allocation6 + $0x12b0] sm:$0xff]
    %v1552 = vld [vmem:[#allocation6 + $0x12b8] sm:$0xff]
    %v1553 = vld [vmem:[#allocation6 + $0x12c0] sm:$0xff]
    %v1554 = vld [vmem:[#allocation6 + $0x12c8] sm:$0xff]
    %v1555 = vld [vmem:[#allocation6 + $0x12d0] sm:$0xff]
    %v1556 = vld [vmem:[#allocation6 + $0x12d8] sm:$0xff]
    %v1557 = vld [vmem:[#allocation6 + $0x12e0] sm:$0xff]
    %v1558 = vld [vmem:[#allocation6 + $0x12e8] sm:$0xff]
    %v1559 = vld [vmem:[#allocation6 + $0x12f0] sm:$0xff]
    %v1560 = vld [vmem:[#allocation6 + $0x12f8] sm:$0xff]
    %v1561 = vld [vmem:[#allocation6 + $0x1300] sm:$0xff]
    %v1562 = vld [vmem:[#allocation6 + $0x1308] sm:$0xff]
    %v1563 = vld [vmem:[#allocation6 + $0x1310] sm:$0xff]
    %v1564 = vld [vmem:[#allocation6 + $0x1318] sm:$0xff]
    %v1565 = vld [vmem:[#allocation6 + $0x1320] sm:$0xff]
    %v1566 = vld [vmem:[#allocation6 + $0x1328] sm:$0xff]
    %v1567 = vld [vmem:[#allocation6 + $0x1330] sm:$0xff]
    %v1568 = vld [vmem:[#allocation6 + $0x1338] sm:$0xff]
    %v1569 = vld [vmem:[#allocation6 + $0x1340] sm:$0xff]
    %v1570 = vld [vmem:[#allocation6 + $0x1348] sm:$0xff]
    %v1571 = vld [vmem:[#allocation6 + $0x1350] sm:$0xff]
    %v1572 = vld [vmem:[#allocation6 + $0x1358] sm:$0xff]
    %v1573 = vld [vmem:[#allocation6 + $0x1360] sm:$0xff]
    %v1574 = vld [vmem:[#allocation6 + $0x1368] sm:$0xff]
    %v1575 = vld [vmem:[#allocation6 + $0x1370] sm:$0xff]
    %v1576 = vld [vmem:[#allocation6 + $0x1378] sm:$0xff]
    %v1577 = vld [vmem:[#allocation6 + $0x1380] sm:$0xff]
    %v1578 = vld [vmem:[#allocation6 + $0x1388] sm:$0xff]
    %v1579 = vld [vmem:[#allocation6 + $0x1390] sm:$0xff]
    %v1580 = vld [vmem:[#allocation6 + $0x1398] sm:$0xff]
    %v1581 = vld [vmem:[#allocation6 + $0x13a0] sm:$0xff]
    %v1582 = vld [vmem:[#allocation6 + $0x13a8] sm:$0xff]
    %v1583 = vld [vmem:[#allocation6 + $0x13b0] sm:$0xff]
    %v1584 = vld [vmem:[#allocation6 + $0x13b8] sm:$0xff]
    %v1585 = vld [vmem:[#allocation6 + $0x13c0] sm:$0xff]
    %v1586 = vld [vmem:[#allocation6 + $0x13c8] sm:$0xff]
    %v1587 = vld [vmem:[#allocation6 + $0x13d0] sm:$0xff]
    %v1588 = vld [vmem:[#allocation6 + $0x13d8] sm:$0xff]
    %v1589 = vld [vmem:[#allocation6 + $0x13e0] sm:$0xff]
    %v1590 = vld [vmem:[#allocation6 + $0x13e8] sm:$0xff]
    %v1591 = vld [vmem:[#allocation6 + $0x13f0] sm:$0xff]
    %v1592 = vld [vmem:[#allocation6 + $0x13f8] sm:$0xff]
    %v1593 = vld [vmem:[#allocation7] sm:$0xff]
    %v1595 = vlaneseq
    %v1596 = vshrl.u32 %v1595, 7
    %v1597 = vsub.s32 0, %v1596
    %v1598 = vrot.slane %v1593, %v1597
    %v1599 = vlaneseq
    %v1600 = vshrl.u32 %v1599, 7
    %v1601 = vsub.s32 1, %v1600
    %v1602 = vrot.slane %v1593, %v1601
    %v1603 = vlaneseq
    %v1604 = vshrl.u32 %v1603, 7
    %v1605 = vsub.s32 2, %v1604
    %v1606 = vrot.slane %v1593, %v1605
    %v1607 = vlaneseq
    %v1608 = vshrl.u32 %v1607, 7
    %v1609 = vsub.s32 3, %v1608
    %v1610 = vrot.slane %v1593, %v1609
    %v1611 = vlaneseq
    %v1612 = vshrl.u32 %v1611, 7
    %v1613 = vsub.s32 4, %v1612
    %v1614 = vrot.slane %v1593, %v1613
    %v1615 = vlaneseq
    %v1616 = vshrl.u32 %v1615, 7
    %v1617 = vsub.s32 5, %v1616
    %v1618 = vrot.slane %v1593, %v1617
    %v1619 = vlaneseq
    %v1620 = vshrl.u32 %v1619, 7
    %v1621 = vsub.s32 6, %v1620
    %v1622 = vrot.slane %v1593, %v1621
    %v1623 = vlaneseq
    %v1624 = vshrl.u32 %v1623, 7
    %v1625 = vsub.s32 7, %v1624
    %v1626 = vrot.slane %v1593, %v1625
    %1635 = vmatprep.subr.mxu0 %v954
    %1636 = vmatpush1.msra.mxu0 %v953
    %1637 = vmatprep.subr.mxu0 %v962
    %1638 = vmatpush1.msra.mxu0 %v961
    %1639 = vmatprep.subr.mxu0 %v970
    %1640 = vmatpush1.msra.mxu0 %v969
    %1641 = vmatprep.subr.mxu0 %v978
    %1642 = vmatpush1.msra.mxu0 %v977
    %1643 = vmatprep.subr.mxu0 %v986
    %1644 = vmatpush1.msra.mxu0 %v985
    %1645 = vmatprep.subr.mxu0 %v994
    %1646 = vmatpush1.msra.mxu0 %v993
    %1647 = vmatprep.subr.mxu0 %v1002
    %1648 = vmatpush1.msra.mxu0 %v1001
    %1649 = vmatprep.subr.mxu0 %v1010
    %1650 = vmatpush1.msra.mxu0 %v1009
    %1651 = vmatprep.subr.mxu0 %v1018
    %1652 = vmatpush1.msra.mxu0 %v1017
    %1653 = vmatprep.subr.mxu0 %v1026
    %1654 = vmatpush1.msra.mxu0 %v1025
    %1655 = vmatprep.subr.mxu0 %v1034
    %1656 = vmatpush1.msra.mxu0 %v1033
    %1657 = vmatprep.subr.mxu0 %v1042
    %1658 = vmatpush1.msra.mxu0 %v1041
    %1659 = vmatprep.subr.mxu0 %v1050
    %1660 = vmatpush1.msra.mxu0 %v1049
    %1661 = vmatprep.subr.mxu0 %v1058
    %1662 = vmatpush1.msra.mxu0 %v1057
    %1663 = vmatprep.subr.mxu0 %v1066
    %1664 = vmatpush1.msra.mxu0 %v1065
    %1665 = vmatprep.subr.mxu0 %v1074
    %1666 = vmatpush1.msra.mxu0 %v1073
    %1667 = vmatprep.subr.mxu0 %v1082
    %1668 = vmatpush1.msra.mxu0 %v1081
    %1669 = vmatprep.subr.mxu0 %v1090
    %1670 = vmatpush1.msra.mxu0 %v1089
    %1671 = vmatprep.subr.mxu0 %v1098
    %1672 = vmatpush1.msra.mxu0 %v1097
    %1673 = vmatprep.subr.mxu0 %v1106
    %1674 = vmatpush1.msra.mxu0 %v1105
    %1675 = vmatprep.subr.mxu0 %v1114
    %1676 = vmatpush1.msra.mxu0 %v1113
    %1677 = vmatprep.subr.mxu0 %v1122
    %1678 = vmatpush1.msra.mxu0 %v1121
    %1679 = vmatprep.subr.mxu0 %v1130
    %1680 = vmatpush1.msra.mxu0 %v1129
    %1681 = vmatprep.subr.mxu0 %v1138
    %1682 = vmatpush1.msra.mxu0 %v1137
    %1683 = vmatprep.subr.mxu0 %v1146
    %1684 = vmatpush1.msra.mxu0 %v1145
    %1685 = vmatprep.subr.mxu0 %v1154
    %1686 = vmatpush1.msra.mxu0 %v1153
    %1687 = vmatprep.subr.mxu0 %v1162
    %1688 = vmatpush1.msra.mxu0 %v1161
    %1689 = vmatprep.subr.mxu0 %v1170
    %1690 = vmatpush1.msra.mxu0 %v1169
    %1691 = vmatprep.subr.mxu0 %v1178
    %1692 = vmatpush1.msra.mxu0 %v1177
    %1693 = vmatprep.subr.mxu0 %v1186
    %1694 = vmatpush1.msra.mxu0 %v1185
    %1695 = vmatprep.subr.mxu0 %v1194
    %1696 = vmatpush1.msra.mxu0 %v1193
    %1697 = vmatprep.subr.mxu0 %v1202
    %1698 = vmatpush1.msra.mxu0 %v1201
    %1699 = vmatprep.mubr.f32.mxu0 %v949
    %1700 = vmatmul.mubr.f32.gmra.mrb[0].mxu0 %v948
    %v1701 = vpop.f32.mrb[0].mxu0
    %v1702 = vadd.f32 %v1598, %v1701
    %v1703 = vpop.f32.mrb[0].mxu0
    %v1704 = vadd.f32 %v1602, %v1703
    %1705 = vdwg.mxu0
    %1706 = vmatprep.subr.mxu0 %v1210
    %1707 = vmatpush1.msra.mxu0 %v1209
    %1708 = vmatprep.subr.mxu0 %v1218
    %1709 = vmatpush1.msra.mxu0 %v1217
    %1710 = vmatprep.subr.mxu0 %v1226
    %1711 = vmatpush1.msra.mxu0 %v1225
    %1712 = vmatprep.subr.mxu0 %v1234
    %1713 = vmatpush1.msra.mxu0 %v1233
    %1714 = vmatprep.subr.mxu0 %v1242
    %1715 = vmatpush1.msra.mxu0 %v1241
    %1716 = vmatprep.subr.mxu0 %v1250
    %1717 = vmatpush1.msra.mxu0 %v1249
    %1718 = vmatprep.subr.mxu0 %v1258
    %1719 = vmatpush1.msra.mxu0 %v1257
    %1720 = vmatprep.subr.mxu0 %v1266
    %1721 = vmatpush1.msra.mxu0 %v1265
    %1722 = vmatprep.subr.mxu0 %v1274
    %1723 = vmatpush1.msra.mxu0 %v1273
    %1724 = vmatprep.subr.mxu0 %v1282
    %1725 = vmatpush1.msra.mxu0 %v1281
    %1726 = vmatprep.subr.mxu0 %v1290
    %1727 = vmatpush1.msra.mxu0 %v1289
    %1728 = vmatprep.subr.mxu0 %v1298
    %1729 = vmatpush1.msra.mxu0 %v1297
    %1730 = vmatprep.subr.mxu0 %v1306
    %1731 = vmatpush1.msra.mxu0 %v1305
    %1732 = vmatprep.subr.mxu0 %v1314
    %1733 = vmatpush1.msra.mxu0 %v1313
    %1734 = vmatprep.subr.mxu0 %v1322
    %1735 = vmatpush1.msra.mxu0 %v1321
    %1736 = vmatprep.subr.mxu0 %v1330
    %1737 = vmatpush1.msra.mxu0 %v1329
    %1738 = vmatprep.subr.mxu0 %v1338
    %1739 = vmatpush1.msra.mxu0 %v1337
    %1740 = vmatprep.subr.mxu0 %v1346
    %1741 = vmatpush1.msra.mxu0 %v1345
    %1742 = vmatprep.subr.mxu0 %v1354
    %1743 = vmatpush1.msra.mxu0 %v1353
    %1744 = vmatprep.subr.mxu0 %v1362
    %1745 = vmatpush1.msra.mxu0 %v1361
    %1746 = vmatprep.subr.mxu0 %v1370
    %1747 = vmatpush1.msra.mxu0 %v1369
    %1748 = vmatprep.subr.mxu0 %v1378
    %1749 = vmatpush1.msra.mxu0 %v1377
    %1750 = vmatprep.subr.mxu0 %v1386
    %1751 = vmatpush1.msra.mxu0 %v1385
    %1752 = vmatprep.subr.mxu0 %v1394
    %1753 = vmatpush1.msra.mxu0 %v1393
    %1754 = vmatprep.subr.mxu0 %v1402
    %1755 = vmatpush1.msra.mxu0 %v1401
    %1756 = vmatprep.subr.mxu0 %v1410
    %1757 = vmatpush1.msra.mxu0 %v1409
    %1758 = vmatprep.subr.mxu0 %v1418
    %1759 = vmatpush1.msra.mxu0 %v1417
    %1760 = vmatprep.subr.mxu0 %v1426
    %1761 = vmatpush1.msra.mxu0 %v1425
    %1762 = vmatprep.subr.mxu0 %v1434
    %1763 = vmatpush1.msra.mxu0 %v1433
    %1764 = vmatprep.subr.mxu0 %v1442
    %1765 = vmatpush1.msra.mxu0 %v1441
    %1766 = vmatprep.subr.mxu0 %v1450
    %1767 = vmatpush1.msra.mxu0 %v1449
    %1768 = vmatprep.subr.mxu0 %v1458
    %1769 = vmatpush1.msra.mxu0 %v1457
    %1770 = vmatprep.mubr.f32.mxu0 %v951
    %1771 = vmatmul.mubr.f32.gmra.mrb[0].mxu0 %v950
    %v1772 = vpop.f32.mrb[0].mxu0
    %v1773 = vadd.f32 %v1702, %v1772
    %v1774 = vpop.f32.mrb[0].mxu0
    %v1775 = vadd.f32 %v1704, %v1774
    %1776 = vdwg.mxu0
    %1777 = vmatprep.subr.mxu0 %v1466
    %1778 = vmatpush1.msra.mxu0 %v1465
    %1779 = vmatprep.subr.mxu0 %v1474
    %1780 = vmatpush1.msra.mxu0 %v1473
    %1781 = vmatprep.subr.mxu0 %v1482
    %1782 = vmatpush1.msra.mxu0 %v1481
    %1783 = vmatprep.subr.mxu0 %v1490
    %1784 = vmatpush1.msra.mxu0 %v1489
    %1785 = vmatprep.subr.mxu0 %v1498
    %1786 = vmatpush1.msra.mxu0 %v1497
    %1787 = vmatprep.subr.mxu0 %v1506
    %1788 = vmatpush1.msra.mxu0 %v1505
    %1789 = vmatprep.subr.mxu0 %v1514
    %1790 = vmatpush1.msra.mxu0 %v1513
    %1791 = vmatprep.subr.mxu0 %v1522
    %1792 = vmatpush1.msra.mxu0 %v1521
    %1793 = vmatprep.subr.mxu0 %v1530
    %1794 = vmatpush1.msra.mxu0 %v1529
    %1795 = vmatprep.subr.mxu0 %v1538
    %1796 = vmatpush1.msra.mxu0 %v1537
    %1797 = vmatprep.subr.mxu0 %v1546
    %1798 = vmatpush1.msra.mxu0 %v1545
    %1799 = vmatprep.subr.mxu0 %v1554
    %1800 = vmatpush1.msra.mxu0 %v1553
    %1801 = vmatprep.subr.mxu0 %v1562
    %1802 = vmatpush1.msra.mxu0 %v1561
    %1803 = vmatprep.subr.mxu0 %v1570
    %1804 = vmatpush1.msra.mxu0 %v1569
    %1805 = vmatprep.subr.mxu0 %v1578
    %1806 = vmatpush1.msra.mxu0 %v1577
    %1807 = vmatprep.subr.mxu0 %v1586
    %1808 = vmatpush1.msra.mxu0 %v1585
    %1809 = vmatprep.subr.mxu0 0.0
    %1810 = vmatpush1.msra.mxu0 0.0
    %1811 = vmatprep.subr.mxu0 0.0
    %1812 = vmatpush1.msra.mxu0 0.0
    %1813 = vmatprep.subr.mxu0 0.0
    %1814 = vmatpush1.msra.mxu0 0.0
    %1815 = vmatprep.subr.mxu0 0.0
    %1816 = vmatpush1.msra.mxu0 0.0
    %1817 = vmatprep.subr.mxu0 0.0
    %1818 = vmatpush1.msra.mxu0 0.0
    %1819 = vmatprep.subr.mxu0 0.0
    %1820 = vmatpush1.msra.mxu0 0.0
    %1821 = vmatprep.subr.mxu0 0.0
    %1822 = vmatpush1.msra.mxu0 0.0
    %1823 = vmatprep.subr.mxu0 0.0
    %1824 = vmatpush1.msra.mxu0 0.0
    %1825 = vmatprep.subr.mxu0 0.0
    %1826 = vmatpush1.msra.mxu0 0.0
    %1827 = vmatprep.subr.mxu0 0.0
    %1828 = vmatpush1.msra.mxu0 0.0
    %1829 = vmatprep.subr.mxu0 0.0
    %1830 = vmatpush1.msra.mxu0 0.0
    %1831 = vmatprep.subr.mxu0 0.0
    %1832 = vmatpush1.msra.mxu0 0.0
    %1833 = vmatprep.subr.mxu0 0.0
    %1834 = vmatpush1.msra.mxu0 0.0
    %1835 = vmatprep.subr.mxu0 0.0
    %1836 = vmatpush1.msra.mxu0 0.0
    %1837 = vmatprep.subr.mxu0 0.0
    %1838 = vmatpush1.msra.mxu0 0.0
    %1839 = vmatprep.subr.mxu0 0.0
    %1840 = vmatpush1.msra.mxu0 0.0
    %1841 = vmatprep.mubr.f32.mxu0 0.0
    %1842 = vmatmul.mubr.f32.gmra.mrb[0].mxu0 %v952
    %v1843 = vpop.f32.mrb[0].mxu0
    %v1844 = vadd.f32 %v1773, %v1843
    %v1845 = vpop.f32.mrb[0].mxu0
    %v1846 = vadd.f32 %v1775, %v1845
    %1847 = vdwg.mxu0
    %1848 = vmatprep.subr.mxu0 %v956
    %1849 = vmatpush1.msra.mxu0 %v955
    %1850 = vmatprep.subr.mxu0 %v964
    %1851 = vmatpush1.msra.mxu0 %v963
    %1852 = vmatprep.subr.mxu0 %v972
    %1853 = vmatpush1.msra.mxu0 %v971
    %1854 = vmatprep.subr.mxu0 %v980
    %1855 = vmatpush1.msra.mxu0 %v979
    %1856 = vmatprep.subr.mxu0 %v988
    %1857 = vmatpush1.msra.mxu0 %v987
    %1858 = vmatprep.subr.mxu0 %v996
    %1859 = vmatpush1.msra.mxu0 %v995
    %1860 = vmatprep.subr.mxu0 %v1004
    %1861 = vmatpush1.msra.mxu0 %v1003
    %1862 = vmatprep.subr.mxu0 %v1012
    %1863 = vmatpush1.msra.mxu0 %v1011
    %1864 = vmatprep.subr.mxu0 %v1020
    %1865 = vmatpush1.msra.mxu0 %v1019
    %1866 = vmatprep.subr.mxu0 %v1028
    %1867 = vmatpush1.msra.mxu0 %v1027
    %1868 = vmatprep.subr.mxu0 %v1036
    %1869 = vmatpush1.msra.mxu0 %v1035
    %1870 = vmatprep.subr.mxu0 %v1044
    %1871 = vmatpush1.msra.mxu0 %v1043
    %1872 = vmatprep.subr.mxu0 %v1052
    %1873 = vmatpush1.msra.mxu0 %v1051
    %1874 = vmatprep.subr.mxu0 %v1060
    %1875 = vmatpush1.msra.mxu0 %v1059
    %1876 = vmatprep.subr.mxu0 %v1068
    %1877 = vmatpush1.msra.mxu0 %v1067
    %1878 = vmatprep.subr.mxu0 %v1076
    %1879 = vmatpush1.msra.mxu0 %v1075
    %1880 = vmatprep.subr.mxu0 %v1084
    %1881 = vmatpush1.msra.mxu0 %v1083
    %1882 = vmatprep.subr.mxu0 %v1092
    %1883 = vmatpush1.msra.mxu0 %v1091
    %1884 = vmatprep.subr.mxu0 %v1100
    %1885 = vmatpush1.msra.mxu0 %v1099
    %1886 = vmatprep.subr.mxu0 %v1108
    %1887 = vmatpush1.msra.mxu0 %v1107
    %1888 = vmatprep.subr.mxu0 %v1116
    %1889 = vmatpush1.msra.mxu0 %v1115
    %1890 = vmatprep.subr.mxu0 %v1124
    %1891 = vmatpush1.msra.mxu0 %v1123
    %1892 = vmatprep.subr.mxu0 %v1132
    %1893 = vmatpush1.msra.mxu0 %v1131
    %1894 = vmatprep.subr.mxu0 %v1140
    %1895 = vmatpush1.msra.mxu0 %v1139
    %1896 = vmatprep.subr.mxu0 %v1148
    %1897 = vmatpush1.msra.mxu0 %v1147
    %1898 = vmatprep.subr.mxu0 %v1156
    %1899 = vmatpush1.msra.mxu0 %v1155
    %1900 = vmatprep.subr.mxu0 %v1164
    %1901 = vmatpush1.msra.mxu0 %v1163
    %1902 = vmatprep.subr.mxu0 %v1172
    %1903 = vmatpush1.msra.mxu0 %v1171
    %1904 = vmatprep.subr.mxu0 %v1180
    %1905 = vmatpush1.msra.mxu0 %v1179
    %1906 = vmatprep.subr.mxu0 %v1188
    %1907 = vmatpush1.msra.mxu0 %v1187
    %1908 = vmatprep.subr.mxu0 %v1196
    %1909 = vmatpush1.msra.mxu0 %v1195
    %1910 = vmatprep.subr.mxu0 %v1204
    %1911 = vmatpush1.msra.mxu0 %v1203
    %1912 = vmatprep.mubr.f32.mxu0 %v949
    %1913 = vmatmul.mubr.f32.gmra.mrb[0].mxu0 %v948
    %v1914 = vpop.f32.mrb[0].mxu0
    %v1915 = vadd.f32 %v1606, %v1914
    %v1916 = vpop.f32.mrb[0].mxu0
    %v1917 = vadd.f32 %v1610, %v1916
    %1918 = vdwg.mxu0
    %1919 = vmatprep.subr.mxu0 %v1212
    %1920 = vmatpush1.msra.mxu0 %v1211
    %1921 = vmatprep.subr.mxu0 %v1220
    %1922 = vmatpush1.msra.mxu0 %v1219
    %1923 = vmatprep.subr.mxu0 %v1228
    %1924 = vmatpush1.msra.mxu0 %v1227
    %1925 = vmatprep.subr.mxu0 %v1236
    %1926 = vmatpush1.msra.mxu0 %v1235
    %1927 = vmatprep.subr.mxu0 %v1244
    %1928 = vmatpush1.msra.mxu0 %v1243
    %1929 = vmatprep.subr.mxu0 %v1252
    %1930 = vmatpush1.msra.mxu0 %v1251
    %1931 = vmatprep.subr.mxu0 %v1260
    %1932 = vmatpush1.msra.mxu0 %v1259
    %1933 = vmatprep.subr.mxu0 %v1268
    %1934 = vmatpush1.msra.mxu0 %v1267
    %1935 = vmatprep.subr.mxu0 %v1276
    %1936 = vmatpush1.msra.mxu0 %v1275
    %1937 = vmatprep.subr.mxu0 %v1284
    %1938 = vmatpush1.msra.mxu0 %v1283
    %1939 = vmatprep.subr.mxu0 %v1292
    %1940 = vmatpush1.msra.mxu0 %v1291
    %1941 = vmatprep.subr.mxu0 %v1300
    %1942 = vmatpush1.msra.mxu0 %v1299
    %1943 = vmatprep.subr.mxu0 %v1308
    %1944 = vmatpush1.msra.mxu0 %v1307
    %1945 = vmatprep.subr.mxu0 %v1316
    %1946 = vmatpush1.msra.mxu0 %v1315
    %1947 = vmatprep.subr.mxu0 %v1324
    %1948 = vmatpush1.msra.mxu0 %v1323
    %1949 = vmatprep.subr.mxu0 %v1332
    %1950 = vmatpush1.msra.mxu0 %v1331
    %1951 = vmatprep.subr.mxu0 %v1340
    %1952 = vmatpush1.msra.mxu0 %v1339
    %1953 = vmatprep.subr.mxu0 %v1348
    %1954 = vmatpush1.msra.mxu0 %v1347
    %1955 = vmatprep.subr.mxu0 %v1356
    %1956 = vmatpush1.msra.mxu0 %v1355
    %1957 = vmatprep.subr.mxu0 %v1364
    %1958 = vmatpush1.msra.mxu0 %v1363
    %1959 = vmatprep.subr.mxu0 %v1372
    %1960 = vmatpush1.msra.mxu0 %v1371
    %1961 = vmatprep.subr.mxu0 %v1380
    %1962 = vmatpush1.msra.mxu0 %v1379
    %1963 = vmatprep.subr.mxu0 %v1388
    %1964 = vmatpush1.msra.mxu0 %v1387
    %1965 = vmatprep.subr.mxu0 %v1396
    %1966 = vmatpush1.msra.mxu0 %v1395
    %1967 = vmatprep.subr.mxu0 %v1404
    %1968 = vmatpush1.msra.mxu0 %v1403
    %1969 = vmatprep.subr.mxu0 %v1412
    %1970 = vmatpush1.msra.mxu0 %v1411
    %1971 = vmatprep.subr.mxu0 %v1420
    %1972 = vmatpush1.msra.mxu0 %v1419
    %1973 = vmatprep.subr.mxu0 %v1428
    %1974 = vmatpush1.msra.mxu0 %v1427
    %1975 = vmatprep.subr.mxu0 %v1436
    %1976 = vmatpush1.msra.mxu0 %v1435
    %1977 = vmatprep.subr.mxu0 %v1444
    %1978 = vmatpush1.msra.mxu0 %v1443
    %1979 = vmatprep.subr.mxu0 %v1452
    %1980 = vmatpush1.msra.mxu0 %v1451
    %1981 = vmatprep.subr.mxu0 %v1460
    %1982 = vmatpush1.msra.mxu0 %v1459
    %1983 = vmatprep.mubr.f32.mxu0 %v951
    %1984 = vmatmul.mubr.f32.gmra.mrb[0].mxu0 %v950
    %v1985 = vpop.f32.mrb[0].mxu0
    %v1986 = vadd.f32 %v1915, %v1985
    %v1987 = vpop.f32.mrb[0].mxu0
    %v1988 = vadd.f32 %v1917, %v1987
    %1989 = vdwg.mxu0
    %1990 = vmatprep.subr.mxu0 %v1468
    %1991 = vmatpush1.msra.mxu0 %v1467
    %1992 = vmatprep.subr.mxu0 %v1476
    %1993 = vmatpush1.msra.mxu0 %v1475
    %1994 = vmatprep.subr.mxu0 %v1484
    %1995 = vmatpush1.msra.mxu0 %v1483
    %1996 = vmatprep.subr.mxu0 %v1492
    %1997 = vmatpush1.msra.mxu0 %v1491
    %1998 = vmatprep.subr.mxu0 %v1500
    %1999 = vmatpush1.msra.mxu0 %v1499
    %2000 = vmatprep.subr.mxu0 %v1508
    %2001 = vmatpush1.msra.mxu0 %v1507
    %2002 = vmatprep.subr.mxu0 %v1516
    %2003 = vmatpush1.msra.mxu0 %v1515
    %2004 = vmatprep.subr.mxu0 %v1524
    %2005 = vmatpush1.msra.mxu0 %v1523
    %2006 = vmatprep.subr.mxu0 %v1532
    %2007 = vmatpush1.msra.mxu0 %v1531
    %2008 = vmatprep.subr.mxu0 %v1540
    %2009 = vmatpush1.msra.mxu0 %v1539
    %2010 = vmatprep.subr.mxu0 %v1548
    %2011 = vmatpush1.msra.mxu0 %v1547
    %2012 = vmatprep.subr.mxu0 %v1556
    %2013 = vmatpush1.msra.mxu0 %v1555
    %2014 = vmatprep.subr.mxu0 %v1564
    %2015 = vmatpush1.msra.mxu0 %v1563
    %2016 = vmatprep.subr.mxu0 %v1572
    %2017 = vmatpush1.msra.mxu0 %v1571
    %2018 = vmatprep.subr.mxu0 %v1580
    %2019 = vmatpush1.msra.mxu0 %v1579
    %2020 = vmatprep.subr.mxu0 %v1588
    %2021 = vmatpush1.msra.mxu0 %v1587
    %2022 = vmatprep.subr.mxu0 0.0
    %2023 = vmatpush1.msra.mxu0 0.0
    %2024 = vmatprep.subr.mxu0 0.0
    %2025 = vmatpush1.msra.mxu0 0.0
    %2026 = vmatprep.subr.mxu0 0.0
    %2027 = vmatpush1.msra.mxu0 0.0
    %2028 = vmatprep.subr.mxu0 0.0
    %2029 = vmatpush1.msra.mxu0 0.0
    %2030 = vmatprep.subr.mxu0 0.0
    %2031 = vmatpush1.msra.mxu0 0.0
    %2032 = vmatprep.subr.mxu0 0.0
    %2033 = vmatpush1.msra.mxu0 0.0
    %2034 = vmatprep.subr.mxu0 0.0
    %2035 = vmatpush1.msra.mxu0 0.0
    %2036 = vmatprep.subr.mxu0 0.0
    %2037 = vmatpush1.msra.mxu0 0.0
    %2038 = vmatprep.subr.mxu0 0.0
    %2039 = vmatpush1.msra.mxu0 0.0
    %2040 = vmatprep.subr.mxu0 0.0
    %2041 = vmatpush1.msra.mxu0 0.0
    %2042 = vmatprep.subr.mxu0 0.0
    %2043 = vmatpush1.msra.mxu0 0.0
    %2044 = vmatprep.subr.mxu0 0.0
    %2045 = vmatpush1.msra.mxu0 0.0
    %2046 = vmatprep.subr.mxu0 0.0
    %2047 = vmatpush1.msra.mxu0 0.0
    %2048 = vmatprep.subr.mxu0 0.0
    %2049 = vmatpush1.msra.mxu0 0.0
    %2050 = vmatprep.subr.mxu0 0.0
    %2051 = vmatpush1.msra.mxu0 0.0
    %2052 = vmatprep.subr.mxu0 0.0
    %2053 = vmatpush1.msra.mxu0 0.0
    %2054 = vmatprep.mubr.f32.mxu0 0.0
    %2055 = vmatmul.mubr.f32.gmra.mrb[0].mxu0 %v952
    %v2056 = vpop.f32.mrb[0].mxu0
    %v2057 = vadd.f32 %v1986, %v2056
    %v2058 = vpop.f32.mrb[0].mxu0
    %v2059 = vadd.f32 %v1988, %v2058
    %2060 = vdwg.mxu0
    %2061 = vmatprep.subr.mxu0 %v958
    %2062 = vmatpush1.msra.mxu0 %v957
    %2063 = vmatprep.subr.mxu0 %v966
    %2064 = vmatpush1.msra.mxu0 %v965
    %2065 = vmatprep.subr.mxu0 %v974
    %2066 = vmatpush1.msra.mxu0 %v973
    %2067 = vmatprep.subr.mxu0 %v982
    %2068 = vmatpush1.msra.mxu0 %v981
    %2069 = vmatprep.subr.mxu0 %v990
    %2070 = vmatpush1.msra.mxu0 %v989
    %2071 = vmatprep.subr.mxu0 %v998
    %2072 = vmatpush1.msra.mxu0 %v997
    %2073 = vmatprep.subr.mxu0 %v1006
    %2074 = vmatpush1.msra.mxu0 %v1005
    %2075 = vmatprep.subr.mxu0 %v1014
    %2076 = vmatpush1.msra.mxu0 %v1013
    %2077 = vmatprep.subr.mxu0 %v1022
    %2078 = vmatpush1.msra.mxu0 %v1021
    %2079 = vmatprep.subr.mxu0 %v1030
    %2080 = vmatpush1.msra.mxu0 %v1029
    %2081 = vmatprep.subr.mxu0 %v1038
    %2082 = vmatpush1.msra.mxu0 %v1037
    %2083 = vmatprep.subr.mxu0 %v1046
    %2084 = vmatpush1.msra.mxu0 %v1045
    %2085 = vmatprep.subr.mxu0 %v1054
    %2086 = vmatpush1.msra.mxu0 %v1053
    %2087 = vmatprep.subr.mxu0 %v1062
    %2088 = vmatpush1.msra.mxu0 %v1061
    %2089 = vmatprep.subr.mxu0 %v1070
    %2090 = vmatpush1.msra.mxu0 %v1069
    %2091 = vmatprep.subr.mxu0 %v1078
    %2092 = vmatpush1.msra.mxu0 %v1077
    %2093 = vmatprep.subr.mxu0 %v1086
    %2094 = vmatpush1.msra.mxu0 %v1085
    %2095 = vmatprep.subr.mxu0 %v1094
    %2096 = vmatpush1.msra.mxu0 %v1093
    %2097 = vmatprep.subr.mxu0 %v1102
    %2098 = vmatpush1.msra.mxu0 %v1101
    %2099 = vmatprep.subr.mxu0 %v1110
    %2100 = vmatpush1.msra.mxu0 %v1109
    %2101 = vmatprep.subr.mxu0 %v1118
    %2102 = vmatpush1.msra.mxu0 %v1117
    %2103 = vmatprep.subr.mxu0 %v1126
    %2104 = vmatpush1.msra.mxu0 %v1125
    %2105 = vmatprep.subr.mxu0 %v1134
    %2106 = vmatpush1.msra.mxu0 %v1133
    %2107 = vmatprep.subr.mxu0 %v1142
    %2108 = vmatpush1.msra.mxu0 %v1141
    %2109 = vmatprep.subr.mxu0 %v1150
    %2110 = vmatpush1.msra.mxu0 %v1149
    %2111 = vmatprep.subr.mxu0 %v1158
    %2112 = vmatpush1.msra.mxu0 %v1157
    %2113 = vmatprep.subr.mxu0 %v1166
    %2114 = vmatpush1.msra.mxu0 %v1165
    %2115 = vmatprep.subr.mxu0 %v1174
    %2116 = vmatpush1.msra.mxu0 %v1173
    %2117 = vmatprep.subr.mxu0 %v1182
    %2118 = vmatpush1.msra.mxu0 %v1181
    %2119 = vmatprep.subr.mxu0 %v1190
    %2120 = vmatpush1.msra.mxu0 %v1189
    %2121 = vmatprep.subr.mxu0 %v1198
    %2122 = vmatpush1.msra.mxu0 %v1197
    %2123 = vmatprep.subr.mxu0 %v1206
    %2124 = vmatpush1.msra.mxu0 %v1205
    %2125 = vmatprep.mubr.f32.mxu0 %v949
    %2126 = vmatmul.mubr.f32.gmra.mrb[0].mxu0 %v948
    %v2127 = vpop.f32.mrb[0].mxu0
    %v2128 = vadd.f32 %v1614, %v2127
    %v2129 = vpop.f32.mrb[0].mxu0
    %v2130 = vadd.f32 %v1618, %v2129
    %2131 = vdwg.mxu0
    %2132 = vmatprep.subr.mxu0 %v1214
    %2133 = vmatpush1.msra.mxu0 %v1213
    %2134 = vmatprep.subr.mxu0 %v1222
    %2135 = vmatpush1.msra.mxu0 %v1221
    %2136 = vmatprep.subr.mxu0 %v1230
    %2137 = vmatpush1.msra.mxu0 %v1229
    %2138 = vmatprep.subr.mxu0 %v1238
    %2139 = vmatpush1.msra.mxu0 %v1237
    %2140 = vmatprep.subr.mxu0 %v1246
    %2141 = vmatpush1.msra.mxu0 %v1245
    %2142 = vmatprep.subr.mxu0 %v1254
    %2143 = vmatpush1.msra.mxu0 %v1253
    %2144 = vmatprep.subr.mxu0 %v1262
    %2145 = vmatpush1.msra.mxu0 %v1261
    %2146 = vmatprep.subr.mxu0 %v1270
    %2147 = vmatpush1.msra.mxu0 %v1269
    %2148 = vmatprep.subr.mxu0 %v1278
    %2149 = vmatpush1.msra.mxu0 %v1277
    %2150 = vmatprep.subr.mxu0 %v1286
    %2151 = vmatpush1.msra.mxu0 %v1285
    %2152 = vmatprep.subr.mxu0 %v1294
    %2153 = vmatpush1.msra.mxu0 %v1293
    %2154 = vmatprep.subr.mxu0 %v1302
    %2155 = vmatpush1.msra.mxu0 %v1301
    %2156 = vmatprep.subr.mxu0 %v1310
    %2157 = vmatpush1.msra.mxu0 %v1309
    %2158 = vmatprep.subr.mxu0 %v1318
    %2159 = vmatpush1.msra.mxu0 %v1317
    %2160 = vmatprep.subr.mxu0 %v1326
    %2161 = vmatpush1.msra.mxu0 %v1325
    %2162 = vmatprep.subr.mxu0 %v1334
    %2163 = vmatpush1.msra.mxu0 %v1333
    %2164 = vmatprep.subr.mxu0 %v1342
    %2165 = vmatpush1.msra.mxu0 %v1341
    %2166 = vmatprep.subr.mxu0 %v1350
    %2167 = vmatpush1.msra.mxu0 %v1349
    %2168 = vmatprep.subr.mxu0 %v1358
    %2169 = vmatpush1.msra.mxu0 %v1357
    %2170 = vmatprep.subr.mxu0 %v1366
    %2171 = vmatpush1.msra.mxu0 %v1365
    %2172 = vmatprep.subr.mxu0 %v1374
    %2173 = vmatpush1.msra.mxu0 %v1373
    %2174 = vmatprep.subr.mxu0 %v1382
    %2175 = vmatpush1.msra.mxu0 %v1381
    %2176 = vmatprep.subr.mxu0 %v1390
    %2177 = vmatpush1.msra.mxu0 %v1389
    %2178 = vmatprep.subr.mxu0 %v1398
    %2179 = vmatpush1.msra.mxu0 %v1397
    %2180 = vmatprep.subr.mxu0 %v1406
    %2181 = vmatpush1.msra.mxu0 %v1405
    %2182 = vmatprep.subr.mxu0 %v1414
    %2183 = vmatpush1.msra.mxu0 %v1413
    %2184 = vmatprep.subr.mxu0 %v1422
    %2185 = vmatpush1.msra.mxu0 %v1421
    %2186 = vmatprep.subr.mxu0 %v1430
    %2187 = vmatpush1.msra.mxu0 %v1429
    %2188 = vmatprep.subr.mxu0 %v1438
    %2189 = vmatpush1.msra.mxu0 %v1437
    %2190 = vmatprep.subr.mxu0 %v1446
    %2191 = vmatpush1.msra.mxu0 %v1445
    %2192 = vmatprep.subr.mxu0 %v1454
    %2193 = vmatpush1.msra.mxu0 %v1453
    %2194 = vmatprep.subr.mxu0 %v1462
    %2195 = vmatpush1.msra.mxu0 %v1461
    %2196 = vmatprep.mubr.f32.mxu0 %v951
    %2197 = vmatmul.mubr.f32.gmra.mrb[0].mxu0 %v950
    %v2198 = vpop.f32.mrb[0].mxu0
    %v2199 = vadd.f32 %v2128, %v2198
    %v2200 = vpop.f32.mrb[0].mxu0
    %v2201 = vadd.f32 %v2130, %v2200
    %2202 = vdwg.mxu0
    %2203 = vmatprep.subr.mxu0 %v1470
    %2204 = vmatpush1.msra.mxu0 %v1469
    %2205 = vmatprep.subr.mxu0 %v1478
    %2206 = vmatpush1.msra.mxu0 %v1477
    %2207 = vmatprep.subr.mxu0 %v1486
    %2208 = vmatpush1.msra.mxu0 %v1485
    %2209 = vmatprep.subr.mxu0 %v1494
    %2210 = vmatpush1.msra.mxu0 %v1493
    %2211 = vmatprep.subr.mxu0 %v1502
    %2212 = vmatpush1.msra.mxu0 %v1501
    %2213 = vmatprep.subr.mxu0 %v1510
    %2214 = vmatpush1.msra.mxu0 %v1509
    %2215 = vmatprep.subr.mxu0 %v1518
    %2216 = vmatpush1.msra.mxu0 %v1517
    %2217 = vmatprep.subr.mxu0 %v1526
    %2218 = vmatpush1.msra.mxu0 %v1525
    %2219 = vmatprep.subr.mxu0 %v1534
    %2220 = vmatpush1.msra.mxu0 %v1533
    %2221 = vmatprep.subr.mxu0 %v1542
    %2222 = vmatpush1.msra.mxu0 %v1541
    %2223 = vmatprep.subr.mxu0 %v1550
    %2224 = vmatpush1.msra.mxu0 %v1549
    %2225 = vmatprep.subr.mxu0 %v1558
    %2226 = vmatpush1.msra.mxu0 %v1557
    %2227 = vmatprep.subr.mxu0 %v1566
    %2228 = vmatpush1.msra.mxu0 %v1565
    %2229 = vmatprep.subr.mxu0 %v1574
    %2230 = vmatpush1.msra.mxu0 %v1573
    %2231 = vmatprep.subr.mxu0 %v1582
    %2232 = vmatpush1.msra.mxu0 %v1581
    %2233 = vmatprep.subr.mxu0 %v1590
    %2234 = vmatpush1.msra.mxu0 %v1589
    %2235 = vmatprep.subr.mxu0 0.0
    %2236 = vmatpush1.msra.mxu0 0.0
    %2237 = vmatprep.subr.mxu0 0.0
    %2238 = vmatpush1.msra.mxu0 0.0
    %2239 = vmatprep.subr.mxu0 0.0
    %2240 = vmatpush1.msra.mxu0 0.0
    %2241 = vmatprep.subr.mxu0 0.0
    %2242 = vmatpush1.msra.mxu0 0.0
    %2243 = vmatprep.subr.mxu0 0.0
    %2244 = vmatpush1.msra.mxu0 0.0
    %2245 = vmatprep.subr.mxu0 0.0
    %2246 = vmatpush1.msra.mxu0 0.0
    %2247 = vmatprep.subr.mxu0 0.0
    %2248 = vmatpush1.msra.mxu0 0.0
    %2249 = vmatprep.subr.mxu0 0.0
    %2250 = vmatpush1.msra.mxu0 0.0
    %2251 = vmatprep.subr.mxu0 0.0
    %2252 = vmatpush1.msra.mxu0 0.0
    %2253 = vmatprep.subr.mxu0 0.0
    %2254 = vmatpush1.msra.mxu0 0.0
    %2255 = vmatprep.subr.mxu0 0.0
    %2256 = vmatpush1.msra.mxu0 0.0
    %2257 = vmatprep.subr.mxu0 0.0
    %2258 = vmatpush1.msra.mxu0 0.0
    %2259 = vmatprep.subr.mxu0 0.0
    %2260 = vmatpush1.msra.mxu0 0.0
    %2261 = vmatprep.subr.mxu0 0.0
    %2262 = vmatpush1.msra.mxu0 0.0
    %2263 = vmatprep.subr.mxu0 0.0
    %2264 = vmatpush1.msra.mxu0 0.0
    %2265 = vmatprep.subr.mxu0 0.0
    %2266 = vmatpush1.msra.mxu0 0.0
    %2267 = vmatprep.mubr.f32.mxu0 0.0
    %2268 = vmatmul.mubr.f32.gmra.mrb[0].mxu0 %v952
    %v2269 = vpop.f32.mrb[0].mxu0
    %v2270 = vadd.f32 %v2199, %v2269
    %v2271 = vpop.f32.mrb[0].mxu0
    %v2272 = vadd.f32 %v2201, %v2271
    %2273 = vdwg.mxu0
    %2274 = vmatprep.subr.mxu0 %v960
    %2275 = vmatpush1.msra.mxu0 %v959
    %2276 = vmatprep.subr.mxu0 %v968
    %2277 = vmatpush1.msra.mxu0 %v967
    %2278 = vmatprep.subr.mxu0 %v976
    %2279 = vmatpush1.msra.mxu0 %v975
    %2280 = vmatprep.subr.mxu0 %v984
    %2281 = vmatpush1.msra.mxu0 %v983
    %2282 = vmatprep.subr.mxu0 %v992
    %2283 = vmatpush1.msra.mxu0 %v991
    %2284 = vmatprep.subr.mxu0 %v1000
    %2285 = vmatpush1.msra.mxu0 %v999
    %2286 = vmatprep.subr.mxu0 %v1008
    %2287 = vmatpush1.msra.mxu0 %v1007
    %2288 = vmatprep.subr.mxu0 %v1016
    %2289 = vmatpush1.msra.mxu0 %v1015
    %2290 = vmatprep.subr.mxu0 %v1024
    %2291 = vmatpush1.msra.mxu0 %v1023
    %2292 = vmatprep.subr.mxu0 %v1032
    %2293 = vmatpush1.msra.mxu0 %v1031
    %2294 = vmatprep.subr.mxu0 %v1040
    %2295 = vmatpush1.msra.mxu0 %v1039
    %2296 = vmatprep.subr.mxu0 %v1048
    %2297 = vmatpush1.msra.mxu0 %v1047
    %2298 = vmatprep.subr.mxu0 %v1056
    %2299 = vmatpush1.msra.mxu0 %v1055
    %2300 = vmatprep.subr.mxu0 %v1064
    %2301 = vmatpush1.msra.mxu0 %v1063
    %2302 = vmatprep.subr.mxu0 %v1072
    %2303 = vmatpush1.msra.mxu0 %v1071
    %2304 = vmatprep.subr.mxu0 %v1080
    %2305 = vmatpush1.msra.mxu0 %v1079
    %2306 = vmatprep.subr.mxu0 %v1088
    %2307 = vmatpush1.msra.mxu0 %v1087
    %2308 = vmatprep.subr.mxu0 %v1096
    %2309 = vmatpush1.msra.mxu0 %v1095
    %2310 = vmatprep.subr.mxu0 %v1104
    %2311 = vmatpush1.msra.mxu0 %v1103
    %2312 = vmatprep.subr.mxu0 %v1112
    %2313 = vmatpush1.msra.mxu0 %v1111
    %2314 = vmatprep.subr.mxu0 %v1120
    %2315 = vmatpush1.msra.mxu0 %v1119
    %2316 = vmatprep.subr.mxu0 %v1128
    %2317 = vmatpush1.msra.mxu0 %v1127
    %2318 = vmatprep.subr.mxu0 %v1136
    %2319 = vmatpush1.msra.mxu0 %v1135
    %2320 = vmatprep.subr.mxu0 %v1144
    %2321 = vmatpush1.msra.mxu0 %v1143
    %2322 = vmatprep.subr.mxu0 %v1152
    %2323 = vmatpush1.msra.mxu0 %v1151
    %2324 = vmatprep.subr.mxu0 %v1160
    %2325 = vmatpush1.msra.mxu0 %v1159
    %2326 = vmatprep.subr.mxu0 %v1168
    %2327 = vmatpush1.msra.mxu0 %v1167
    %2328 = vmatprep.subr.mxu0 %v1176
    %2329 = vmatpush1.msra.mxu0 %v1175
    %2330 = vmatprep.subr.mxu0 %v1184
    %2331 = vmatpush1.msra.mxu0 %v1183
    %2332 = vmatprep.subr.mxu0 %v1192
    %2333 = vmatpush1.msra.mxu0 %v1191
    %2334 = vmatprep.subr.mxu0 %v1200
    %2335 = vmatpush1.msra.mxu0 %v1199
    %2336 = vmatprep.subr.mxu0 %v1208
    %2337 = vmatpush1.msra.mxu0 %v1207
    %2338 = vmatprep.mubr.f32.mxu0 %v949
    %2339 = vmatmul.mubr.f32.gmra.mrb[0].mxu0 %v948
    %v2340 = vpop.f32.mrb[0].mxu0
    %v2341 = vadd.f32 %v1622, %v2340
    %v2342 = vpop.f32.mrb[0].mxu0
    %v2343 = vadd.f32 %v1626, %v2342
    %2344 = vdwg.mxu0
    %2345 = vmatprep.subr.mxu0 %v1216
    %2346 = vmatpush1.msra.mxu0 %v1215
    %2347 = vmatprep.subr.mxu0 %v1224
    %2348 = vmatpush1.msra.mxu0 %v1223
    %2349 = vmatprep.subr.mxu0 %v1232
    %2350 = vmatpush1.msra.mxu0 %v1231
    %2351 = vmatprep.subr.mxu0 %v1240
    %2352 = vmatpush1.msra.mxu0 %v1239
    %2353 = vmatprep.subr.mxu0 %v1248
    %2354 = vmatpush1.msra.mxu0 %v1247
    %2355 = vmatprep.subr.mxu0 %v1256
    %2356 = vmatpush1.msra.mxu0 %v1255
    %2357 = vmatprep.subr.mxu0 %v1264
    %2358 = vmatpush1.msra.mxu0 %v1263
    %2359 = vmatprep.subr.mxu0 %v1272
    %2360 = vmatpush1.msra.mxu0 %v1271
    %2361 = vmatprep.subr.mxu0 %v1280
    %2362 = vmatpush1.msra.mxu0 %v1279
    %2363 = vmatprep.subr.mxu0 %v1288
    %2364 = vmatpush1.msra.mxu0 %v1287
    %2365 = vmatprep.subr.mxu0 %v1296
    %2366 = vmatpush1.msra.mxu0 %v1295
    %2367 = vmatprep.subr.mxu0 %v1304
    %2368 = vmatpush1.msra.mxu0 %v1303
    %2369 = vmatprep.subr.mxu0 %v1312
    %2370 = vmatpush1.msra.mxu0 %v1311
    %2371 = vmatprep.subr.mxu0 %v1320
    %2372 = vmatpush1.msra.mxu0 %v1319
    %2373 = vmatprep.subr.mxu0 %v1328
    %2374 = vmatpush1.msra.mxu0 %v1327
    %2375 = vmatprep.subr.mxu0 %v1336
    %2376 = vmatpush1.msra.mxu0 %v1335
    %2377 = vmatprep.subr.mxu0 %v1344
    %2378 = vmatpush1.msra.mxu0 %v1343
    %2379 = vmatprep.subr.mxu0 %v1352
    %2380 = vmatpush1.msra.mxu0 %v1351
    %2381 = vmatprep.subr.mxu0 %v1360
    %2382 = vmatpush1.msra.mxu0 %v1359
    %2383 = vmatprep.subr.mxu0 %v1368
    %2384 = vmatpush1.msra.mxu0 %v1367
    %2385 = vmatprep.subr.mxu0 %v1376
    %2386 = vmatpush1.msra.mxu0 %v1375
    %2387 = vmatprep.subr.mxu0 %v1384
    %2388 = vmatpush1.msra.mxu0 %v1383
    %2389 = vmatprep.subr.mxu0 %v1392
    %2390 = vmatpush1.msra.mxu0 %v1391
    %2391 = vmatprep.subr.mxu0 %v1400
    %2392 = vmatpush1.msra.mxu0 %v1399
    %2393 = vmatprep.subr.mxu0 %v1408
    %2394 = vmatpush1.msra.mxu0 %v1407
    %2395 = vmatprep.subr.mxu0 %v1416
    %2396 = vmatpush1.msra.mxu0 %v1415
    %2397 = vmatprep.subr.mxu0 %v1424
    %2398 = vmatpush1.msra.mxu0 %v1423
    %2399 = vmatprep.subr.mxu0 %v1432
    %2400 = vmatpush1.msra.mxu0 %v1431
    %2401 = vmatprep.subr.mxu0 %v1440
    %2402 = vmatpush1.msra.mxu0 %v1439
    %2403 = vmatprep.subr.mxu0 %v1448
    %2404 = vmatpush1.msra.mxu0 %v1447
    %2405 = vmatprep.subr.mxu0 %v1456
    %2406 = vmatpush1.msra.mxu0 %v1455
    %2407 = vmatprep.subr.mxu0 %v1464
    %2408 = vmatpush1.msra.mxu0 %v1463
    %2409 = vmatprep.mubr.f32.mxu0 %v951
    %2410 = vmatmul.mubr.f32.gmra.mrb[0].mxu0 %v950
    %v2411 = vpop.f32.mrb[0].mxu0
    %v2412 = vadd.f32 %v2341, %v2411
    %v2413 = vpop.f32.mrb[0].mxu0
    %v2414 = vadd.f32 %v2343, %v2413
    %2415 = vdwg.mxu0
    %2416 = vmatprep.subr.mxu0 %v1472
    %2417 = vmatpush1.msra.mxu0 %v1471
    %2418 = vmatprep.subr.mxu0 %v1480
    %2419 = vmatpush1.msra.mxu0 %v1479
    %2420 = vmatprep.subr.mxu0 %v1488
    %2421 = vmatpush1.msra.mxu0 %v1487
    %2422 = vmatprep.subr.mxu0 %v1496
    %2423 = vmatpush1.msra.mxu0 %v1495
    %2424 = vmatprep.subr.mxu0 %v1504
    %2425 = vmatpush1.msra.mxu0 %v1503
    %2426 = vmatprep.subr.mxu0 %v1512
    %2427 = vmatpush1.msra.mxu0 %v1511
    %2428 = vmatprep.subr.mxu0 %v1520
    %2429 = vmatpush1.msra.mxu0 %v1519
    %2430 = vmatprep.subr.mxu0 %v1528
    %2431 = vmatpush1.msra.mxu0 %v1527
    %2432 = vmatprep.subr.mxu0 %v1536
    %2433 = vmatpush1.msra.mxu0 %v1535
    %2434 = vmatprep.subr.mxu0 %v1544
    %2435 = vmatpush1.msra.mxu0 %v1543
    %2436 = vmatprep.subr.mxu0 %v1552
    %2437 = vmatpush1.msra.mxu0 %v1551
    %2438 = vmatprep.subr.mxu0 %v1560
    %2439 = vmatpush1.msra.mxu0 %v1559
    %2440 = vmatprep.subr.mxu0 %v1568
    %2441 = vmatpush1.msra.mxu0 %v1567
    %2442 = vmatprep.subr.mxu0 %v1576
    %2443 = vmatpush1.msra.mxu0 %v1575
    %2444 = vmatprep.subr.mxu0 %v1584
    %2445 = vmatpush1.msra.mxu0 %v1583
    %2446 = vmatprep.subr.mxu0 %v1592
    %2447 = vmatpush1.msra.mxu0 %v1591
    %2448 = vmatprep.subr.mxu0 0.0
    %2449 = vmatpush1.msra.mxu0 0.0
    %2450 = vmatprep.subr.mxu0 0.0
    %2451 = vmatpush1.msra.mxu0 0.0
    %2452 = vmatprep.subr.mxu0 0.0
    %2453 = vmatpush1.msra.mxu0 0.0
    %2454 = vmatprep.subr.mxu0 0.0
    %2455 = vmatpush1.msra.mxu0 0.0
    %2456 = vmatprep.subr.mxu0 0.0
    %2457 = vmatpush1.msra.mxu0 0.0
    %2458 = vmatprep.subr.mxu0 0.0
    %2459 = vmatpush1.msra.mxu0 0.0
    %2460 = vmatprep.subr.mxu0 0.0
    %2461 = vmatpush1.msra.mxu0 0.0
    %2462 = vmatprep.subr.mxu0 0.0
    %2463 = vmatpush1.msra.mxu0 0.0
    %2464 = vmatprep.subr.mxu0 0.0
    %2465 = vmatpush1.msra.mxu0 0.0
    %2466 = vmatprep.subr.mxu0 0.0
    %2467 = vmatpush1.msra.mxu0 0.0
    %2468 = vmatprep.subr.mxu0 0.0
    %2469 = vmatpush1.msra.mxu0 0.0
    %2470 = vmatprep.subr.mxu0 0.0
    %2471 = vmatpush1.msra.mxu0 0.0
    %2472 = vmatprep.subr.mxu0 0.0
    %2473 = vmatpush1.msra.mxu0 0.0
    %2474 = vmatprep.subr.mxu0 0.0
    %2475 = vmatpush1.msra.mxu0 0.0
    %2476 = vmatprep.subr.mxu0 0.0
    %2477 = vmatpush1.msra.mxu0 0.0
    %2478 = vmatprep.subr.mxu0 0.0
    %2479 = vmatpush1.msra.mxu0 0.0
    %2480 = vmatprep.mubr.f32.mxu0 0.0
    %2481 = vmatmul.mubr.f32.gmra.mrb[0].mxu0 %v952
    %v2482 = vpop.f32.mrb[0].mxu0
    %v2483 = vadd.f32 %v2412, %v2482
    %v2484 = vpop.f32.mrb[0].mxu0
    %v2485 = vadd.f32 %v2414, %v2484
    %2486 = vdwg.mxu0
    %2487 = vst [vmem:[%s6] sm:$0xff] %v1844
    %2488 = vst [vmem:[%s6 + $0x8] sm:$0xff] %v1846
    %2489 = vst [vmem:[%s6 + $0x10] sm:$0xff] %v2057
    %2490 = vst [vmem:[%s6 + $0x18] sm:$0xff] %v2059
    %2491 = vst [vmem:[%s6 + $0x20] sm:$0xff] %v2270
    %2492 = vst [vmem:[%s6 + $0x28] sm:$0xff] %v2272
    %2493 = vst [vmem:[%s6 + $0x30] sm:$0xff] %v2483
    %2494 = vst [vmem:[%s6 + $0x38] sm:$0xff] %v2485
    // Predicated region
    $region42: #{dynamics_predictor_forward.1} parent=1 // pred_check
      _
    $region43: #{dynamics_predictor_forward.1} parent=1 // pred_check_branch
      %2496 = sbr.rel (0) target = $region45
    $region44: #{dynamics_predictor_forward.1} parent=1 // pred_region
      _
    $region45: #{dynamics_predictor_forward.1} parent=1 // pred_fallthru
      _
    // Predicated region
    $region46: #{dynamics_predictor_forward.1} parent=1 // pred_check
      _
    $region47: #{dynamics_predictor_forward.1} parent=1 // pred_check_branch
      %2498 = sbr.rel (0) target = $region49
    $region48: #{dynamics_predictor_forward.1} parent=1 // pred_region
      _
    $region49: #{dynamics_predictor_forward.1} parent=1 // pred_fallthru
      _
    %2499 = vsyncpa [#allocation3], 1
    %2500 = vsyncpa [#allocation5], 1
    %2501 = vsyncpa [#allocation8], 1

</llo_original>
